<compile_context>
chip_gen: v6e
topology: v6e:2x2x1
jax: 0.10.0
libtpu: 0.0.40
codegen_flags: <defaults>
</compile_context>

<pallas_src>
import jax
import jax.numpy as jnp
from jax import lax
from jax.experimental import pallas as pl
from jax.experimental.pallas import tpu as pltpu


def _round_up(x, m):
    return (x + m - 1) // m * m


# ----------------------------------------------------------------------------
# Pass 1: tiled im2col matmul + per-channel sum / sum-of-squares accumulation
# ----------------------------------------------------------------------------
def _matmul_stats_kernel(p_ref, w_ref, y_ref, sum_ref, sq_ref):
    @pl.when(pl.program_id(0) == 0)
    def _():
        sum_ref[...] = jnp.zeros_like(sum_ref)
        sq_ref[...] = jnp.zeros_like(sq_ref)

    y = jnp.dot(p_ref[...], w_ref[...], preferred_element_type=jnp.float32)
    y_ref[...] = y
    sum_ref[...] += jnp.sum(y, axis=0, keepdims=True)
    sq_ref[...] += jnp.sum(y * y, axis=0, keepdims=True)


def _conv_stats_pallas(patches, w_mat, *, tm):
    Mp, K = patches.shape
    Np = w_mat.shape[1]
    cost = pl.CostEstimate(
        flops=2 * Mp * K * Np,
        transcendentals=0,
        bytes_accessed=4 * (Mp * K + K * Np + Mp * Np),
    )
    return pl.pallas_call(
        _matmul_stats_kernel,
        out_shape=(
            jax.ShapeDtypeStruct((Mp, Np), jnp.float32),
            jax.ShapeDtypeStruct((1, Np), jnp.float32),
            jax.ShapeDtypeStruct((1, Np), jnp.float32),
        ),
        grid=(Mp // tm,),
        in_specs=[
            pl.BlockSpec((tm, K), lambda i: (i, 0)),   # M-tiled patches
            pl.BlockSpec((K, Np), lambda i: (0, 0)),   # resident weight
        ],
        out_specs=(
            pl.BlockSpec((tm, Np), lambda i: (i, 0)),  # conv output tile
            pl.BlockSpec((1, Np), lambda i: (0, 0)),   # resident sum accum
            pl.BlockSpec((1, Np), lambda i: (0, 0)),   # resident sumsq accum
        ),
        compiler_params=pltpu.CompilerParams(
            dimension_semantics=("arbitrary",)),
        cost_estimate=cost,
    )(patches, w_mat)


# ----------------------------------------------------------------------------
# Pass 2: y * scale + shift (+ residual) (+ ReLU), streaming over M tiles
# ----------------------------------------------------------------------------
def _make_affine_kernel(apply_relu, has_residual):
    def kernel(*refs):
        if has_residual:
            y_ref, s_ref, t_ref, r_ref, o_ref = refs
            v = y_ref[...] * s_ref[...] + t_ref[...] + r_ref[...]
        else:
            y_ref, s_ref, t_ref, o_ref = refs
            v = y_ref[...] * s_ref[...] + t_ref[...]
        if apply_relu:
            v = jnp.maximum(v, 0.0)
        o_ref[...] = v.astype(o_ref.dtype)
    return kernel


def _bn_apply_pallas(y, scale, shift, residual=None, *, apply_relu, tm):
    Mp, Np = y.shape
    has_res = residual is not None
    kernel = _make_affine_kernel(apply_relu, has_res)
    inputs = [y, scale, shift]
    in_specs = [
        pl.BlockSpec((tm, Np), lambda i: (i, 0)),
        pl.BlockSpec((1, Np), lambda i: (0, 0)),       # resident scale
        pl.BlockSpec((1, Np), lambda i: (0, 0)),       # resident shift
    ]
    if has_res:
        inputs.append(residual)
        in_specs.append(pl.BlockSpec((tm, Np), lambda i: (i, 0)))
    return pl.pallas_call(
        kernel,
        out_shape=jax.ShapeDtypeStruct((Mp, Np), jnp.float32),
        grid=(Mp // tm,),
        in_specs=in_specs,
        out_specs=pl.BlockSpec((tm, Np), lambda i: (i, 0)),
        compiler_params=pltpu.CompilerParams(
            dimension_semantics=("parallel",)),
    )(*inputs)


# ----------------------------------------------------------------------------
# Host-side glue
# ----------------------------------------------------------------------------
def _fold_bn(s, sq, m_true, gamma_p, beta_p, eps):
    # training-mode (biased) batch statistics, folded into one FMA per element.
    mean = s / m_true
    var = jnp.maximum(sq / m_true - mean * mean, 0.0)
    scale = gamma_p * lax.rsqrt(var + eps)
    shift = beta_p - mean * scale
    return scale, shift


def _im2col_3x3(x_nhwc, stride):
    B, H, W, C = x_nhwc.shape
    xp = jnp.pad(x_nhwc, ((0, 0), (1, 1), (1, 1), (0, 0)))
    Ho = (H + 2 - 3) // stride + 1
    Wo = (W + 2 - 3) // stride + 1
    cols = []
    for kh in range(3):
        for kw in range(3):
            patch = xp[:, kh:kh + (Ho - 1) * stride + 1:stride,
                          kw:kw + (Wo - 1) * stride + 1:stride, :]
            cols.append(patch.reshape(B * Ho * Wo, C))
    return jnp.concatenate(cols, axis=-1), (B, Ho, Wo)


# ----------------------------------------------------------------------------
# ResnetBlock module (deterministic synthetic parameters)
# ----------------------------------------------------------------------------
class ResnetBlockPallas:
    # tm: M-tile size.  256 is a safe default for v5e/v7x; on v6e with bf16
    # operands ~512 is the sweet spot (re-derive per generation / VMEM budget).
    def __init__(self, in_channels, out_channels, stride=1,
                 residual_layer=True, key=None, tm=256, eps=1e-5):
        assert 0 < stride <= 2
        self.in_channels = in_channels
        self.out_channels = out_channels
        self.stride = stride
        self.residual_layer = residual_layer
        self.tm = tm
        self.eps = eps

        ks = jax.random.split(key, 8)
        fan1 = in_channels * 9
        fan2 = out_channels * 9
        # conv weights stored HWIO = (3, 3, Cin, Cout)
        self.w1 = jax.random.normal(ks[0], (3, 3, in_channels, out_channels),
                                    jnp.float32) / jnp.sqrt(fan1)
        self.b1 = 0.1 * jax.random.normal(ks[1], (1, out_channels), jnp.float32)
        self.g1 = 1.0 + 0.1 * jax.random.normal(ks[2], (1, out_channels), jnp.float32)
        self.be1 = 0.1 * jax.random.normal(ks[3], (1, out_channels), jnp.float32)
        self.w2 = jax.random.normal(ks[4], (3, 3, out_channels, out_channels),
                                    jnp.float32) / jnp.sqrt(fan2)
        self.b2 = 0.1 * jax.random.normal(ks[5], (1, out_channels), jnp.float32)
        self.g2 = 1.0 + 0.1 * jax.random.normal(ks[6], (1, out_channels), jnp.float32)
        self.be2 = 0.1 * jax.random.normal(ks[7], (1, out_channels), jnp.float32)
        # Note: b1/b2 are kept for module parity but are mathematically
        # cancelled by the training-mode BN mean subtraction, so the Pallas
        # kernels never read them.

        # Lane-dense padded parameter forms (Cout -> multiple of 128).
        Np = _round_up(out_channels, 128)
        self.cout_padded = Np
        padc = Np - out_channels
        self.w1_mat = jnp.pad(self.w1.reshape(9 * in_channels, out_channels),
                              ((0, 0), (0, padc)))
        self.w2_mat = jnp.pad(self.w2.reshape(9 * out_channels, out_channels),
                              ((0, 0), (0, padc)))
        self.g1p = jnp.pad(self.g1, ((0, 0), (0, padc)))
        self.be1p = jnp.pad(self.be1, ((0, 0), (0, padc)))
        self.g2p = jnp.pad(self.g2, ((0, 0), (0, padc)))
        self.be2p = jnp.pad(self.be2, ((0, 0), (0, padc)))

    # --- identity path (glue: channel zero-pad + optional 2x2 avg-pool) ---
    def _identity(self, x_nhwc):
        if self.in_channels != self.out_channels:
            pad = self.out_channels - self.in_channels
            x_nhwc = jnp.pad(x_nhwc, ((0, 0), (0, 0), (0, 0), (0, pad)))
        if self.stride == 2:
            # TODO(synk): mirrors F.avg_pool2d(x, 2, 2); with stride=2 the torch
            # module's residual shapes mismatch anyway (both convs stride 2).
            B, H, W, C = x_nhwc.shape
            x_nhwc = x_nhwc.reshape(B, H // 2, 2, W // 2, 2, C).mean(axis=(2, 4))
        return x_nhwc

    def _pick_tm(self, m):
        return min(self.tm, _round_up(m, 8))

    def __call__(self, x_nchw):
        x = jnp.transpose(x_nchw, (0, 2, 3, 1)).astype(jnp.float32)  # -> NHWC
        Cout, Np = self.out_channels, self.cout_padded

        # --- stage 1: conv1 -> BN1 -> ReLU (two M-tiled Pallas passes) ---
        p1, (B, H1, W1) = _im2col_3x3(x, self.stride)
        M1 = B * H1 * W1
        tm1 = self._pick_tm(M1)
        M1p = _round_up(M1, tm1)
        p1 = jnp.pad(p1, ((0, M1p - M1), (0, 0)))
        y1, s1, sq1 = _conv_stats_pallas(p1, self.w1_mat, tm=tm1)
        scale1, shift1 = _fold_bn(s1, sq1, M1, self.g1p, self.be1p, self.eps)
        y1n = _bn_apply_pallas(y1, scale1, shift1, apply_relu=True, tm=tm1)
        y1_img = y1n[:M1, :Cout].reshape(B, H1, W1, Cout)

        # --- stage 2: conv2 -> BN2 (+ residual) -> [ReLU] ---
        p2, (B, H2, W2) = _im2col_3x3(y1_img, self.stride)
        M2 = B * H2 * W2
        tm2 = self._pick_tm(M2)
        M2p = _round_up(M2, tm2)
        p2 = jnp.pad(p2, ((0, M2p - M2), (0, 0)))
        y2, s2, sq2 = _conv_stats_pallas(p2, self.w2_mat, tm=tm2)
        scale2, shift2 = _fold_bn(s2, sq2, M2, self.g2p, self.be2p, self.eps)

        if self.residual_layer:
            # (host-side debug print from the torch module removed)
            r = self._identity(x)                       # (B, H2, W2, Cout)
            r_flat = r.reshape(-1, Cout)
            r_flat = jnp.pad(r_flat, ((0, M2p - M2), (0, Np - Cout)))
            out = _bn_apply_pallas(y2, scale2, shift2, residual=r_flat,
                                   apply_relu=True, tm=tm2)
        else:
            out = _bn_apply_pallas(y2, scale2, shift2,
                                   apply_relu=False, tm=tm2)

        out_img = out[:M2, :Cout].reshape(B, H2, W2, Cout)
        return jnp.transpose(out_img, (0, 3, 1, 2))     # back to NCHW


# ----------------------------------------------------------------------------
# Pure-JAX reference (for correctness check; mirrors the torch module)
# ----------------------------------------------------------------------------
def reference_forward(block, x_nchw):
    x = jnp.transpose(x_nchw, (0, 2, 3, 1)).astype(jnp.float32)

    def conv(xx, w, b, stride):
        y = lax.conv_general_dilated(xx, w, (stride, stride), ((1, 1), (1, 1)),
                                     dimension_numbers=('NHWC', 'HWIO', 'NHWC'))
        return y + b.reshape(1, 1, 1, -1)

    def bn(y, g, be, eps=1e-5):
        m = y.mean(axis=(0, 1, 2), keepdims=True)
        v = jnp.square(y - m).mean(axis=(0, 1, 2), keepdims=True)
        return (y - m) * lax.rsqrt(v + eps) * g.reshape(1, 1, 1, -1) + be.reshape(1, 1, 1, -1)

    y = jnp.maximum(bn(conv(x, block.w1, block.b1, block.stride), block.g1, block.be1), 0.0)
    y = bn(conv(y, block.w2, block.b2, block.stride), block.g2, block.be2)
    if block.residual_layer:
        y = jnp.maximum(y + block._identity(x), 0.0)
    return jnp.transpose(y, (0, 3, 1, 2))


if __name__ == "__main__":
    key = jax.random.PRNGKey(0)
    kx, kp = jax.random.split(key)
    B, Cin, Cout, H, W = 2, 4, 8, 16, 16

    x = jax.random.normal(kx, (B, Cin, H, W), jnp.float32)
    block = ResnetBlockPallas(Cin, Cout, stride=1, residual_layer=True, key=kp)

    fwd = jax.jit(block.__call__)
    out = jax.block_until_ready(fwd(x))

    ref = jax.block_until_ready(reference_forward(block, x))
    assert out.shape == (B, Cout, H, W), out.shape
    max_err = float(jnp.max(jnp.abs(out - ref)))
    assert jnp.allclose(out, ref, atol=1e-4, rtol=1e-4), max_err
    print("KERNEL_OK")
</pallas_src>

<mosaic_0001>
module attributes {stable_mosaic.version = 11 : i64} {
  func.func @_matmul_stats_kernel(%arg0: i32, %arg1: memref<256x36xf32, #tpu.memory_space<vmem>>, %arg2: memref<36x128xf32, #tpu.memory_space<vmem>>, %arg3: memref<256x128xf32, #tpu.memory_space<vmem>>, %arg4: memref<1x128xf32, #tpu.memory_space<vmem>>, %arg5: memref<1x128xf32, #tpu.memory_space<vmem>>) attributes {dimension_semantics = [#tpu.dimension_semantics<arbitrary>], iteration_bounds = array<i64: 2>, scalar_prefetch = 0 : i64, scratch_operands = 0 : i64, tpu.core_type = #tpu.core_type<tc>, window_params = [{transform_indices = @transform_0, window_bounds = array<i64: 256, 36>}, {pipeline_mode = #tpu.pipeline_mode<synchronous>, transform_indices = @transform_1, window_bounds = array<i64: 36, 128>}, {transform_indices = @transform_2, window_bounds = array<i64: 256, 128>}, {pipeline_mode = #tpu.pipeline_mode<synchronous>, transform_indices = @transform_3, window_bounds = array<i64: 1, 128>}, {pipeline_mode = #tpu.pipeline_mode<synchronous>, transform_indices = @transform_4, window_bounds = array<i64: 1, 128>}]} {
    %c0_i32 = arith.constant 0 : i32
    %0 = arith.cmpi eq, %arg0, %c0_i32 : i32
    %1 = arith.extui %0 : i1 to i32
    %c0_i32_0 = arith.constant 0 : i32
    %2 = arith.cmpi ne, %1, %c0_i32_0 : i32
    scf.if %2 {
      %cst_16 = arith.constant 0.000000e+00 : f32
      %18 = vector.broadcast %cst_16 : f32 to vector<1x128xf32>
      %c0_17 = arith.constant 0 : index
      %c0_18 = arith.constant 0 : index
      %19 = vector.load %arg4[%c0_17, %c0_18] : memref<1x128xf32, #tpu.memory_space<vmem>>, vector<1x128xf32>
      tpu.vector_store %arg4[%c0_17, %c0_18], %18 {strides = array<i32>} : memref<1x128xf32, #tpu.memory_space<vmem>>, vector<1x128xf32>,
      %cst_19 = arith.constant 0.000000e+00 : f32
      %20 = vector.broadcast %cst_19 : f32 to vector<1x128xf32>
      %c0_20 = arith.constant 0 : index
      %c0_21 = arith.constant 0 : index
      %21 = vector.load %arg5[%c0_20, %c0_21] : memref<1x128xf32, #tpu.memory_space<vmem>>, vector<1x128xf32>
      tpu.vector_store %arg5[%c0_20, %c0_21], %20 {strides = array<i32>} : memref<1x128xf32, #tpu.memory_space<vmem>>, vector<1x128xf32>,
    } else {
    }
    %c0 = arith.constant 0 : index
    %c0_1 = arith.constant 0 : index
    %3 = vector.load %arg1[%c0, %c0_1] : memref<256x36xf32, #tpu.memory_space<vmem>>, vector<256x36xf32>
    %c0_2 = arith.constant 0 : index
    %c0_3 = arith.constant 0 : index
    %4 = vector.load %arg2[%c0_2, %c0_3] : memref<36x128xf32, #tpu.memory_space<vmem>>, vector<36x128xf32>
    %cst = arith.constant dense<0.000000e+00> : vector<256x128xf32>
    %5 = tpu.matmul %3, %4, %cst {dimension_numbers = #tpu.dot_dimension_numbers<[1], [0], [0], [1], [0, 0, 1, 1], [], []>} : vector<256x36xf32>, vector<36x128xf32>, vector<256x128xf32> -> vector<256x128xf32>
    %c0_4 = arith.constant 0 : index
    %c0_5 = arith.constant 0 : index
    %6 = vector.load %arg3[%c0_4, %c0_5] : memref<256x128xf32, #tpu.memory_space<vmem>>, vector<256x128xf32>
    tpu.vector_store %arg3[%c0_4, %c0_5], %5 {strides = array<i32>} : memref<256x128xf32, #tpu.memory_space<vmem>>, vector<256x128xf32>,
    %c0_6 = arith.constant 0 : index
    %c0_7 = arith.constant 0 : index
    %7 = vector.load %arg4[%c0_6, %c0_7] : memref<1x128xf32, #tpu.memory_space<vmem>>, vector<1x128xf32>
    %cst_8 = arith.constant dense<0.000000e+00> : vector<128xf32>
    %8 = vector.multi_reduction <add>, %5, %cst_8 [0] : vector<256x128xf32> to vector<128xf32>
    %9 = vector.shape_cast %8 : vector<128xf32> to vector<1x128xf32>
    %10 = arith.addf %7, %9 : vector<1x128xf32>
    %c0_9 = arith.constant 0 : index
    %c0_10 = arith.constant 0 : index
    %11 = vector.load %arg4[%c0_9, %c0_10] : memref<1x128xf32, #tpu.memory_space<vmem>>, vector<1x128xf32>
    tpu.vector_store %arg4[%c0_9, %c0_10], %10 {strides = array<i32>} : memref<1x128xf32, #tpu.memory_space<vmem>>, vector<1x128xf32>,
    %c0_11 = arith.constant 0 : index
    %c0_12 = arith.constant 0 : index
    %12 = vector.load %arg5[%c0_11, %c0_12] : memref<1x128xf32, #tpu.memory_space<vmem>>, vector<1x128xf32>
    %13 = arith.mulf %5, %5 : vector<256x128xf32>
    %cst_13 = arith.constant dense<0.000000e+00> : vector<128xf32>
    %14 = vector.multi_reduction <add>, %13, %cst_13 [0] : vector<256x128xf32> to vector<128xf32>
    %15 = vector.shape_cast %14 : vector<128xf32> to vector<1x128xf32>
    %16 = arith.addf %12, %15 : vector<1x128xf32>
    %c0_14 = arith.constant 0 : index
    %c0_15 = arith.constant 0 : index
    %17 = vector.load %arg5[%c0_14, %c0_15] : memref<1x128xf32, #tpu.memory_space<vmem>>, vector<1x128xf32>
    tpu.vector_store %arg5[%c0_14, %c0_15], %16 {strides = array<i32>} : memref<1x128xf32, #tpu.memory_space<vmem>>, vector<1x128xf32>,
    return
  }
  func.func @transform_0(%arg0: i32) -> (i32, i32) {
    %c0_i32 = arith.constant 0 : i32
    %c0_i32_0 = arith.constant 0 : i32
    return %arg0, %c0_i32 : i32, i32
  }
  func.func @transform_1(%arg0: i32) -> (i32, i32) {
    %c0_i32 = arith.constant 0 : i32
    %c0_i32_0 = arith.constant 0 : i32
    %c0_i32_1 = arith.constant 0 : i32
    return %c0_i32, %c0_i32_0 : i32, i32
  }
  func.func @transform_2(%arg0: i32) -> (i32, i32) {
    %c0_i32 = arith.constant 0 : i32
    %c0_i32_0 = arith.constant 0 : i32
    return %arg0, %c0_i32 : i32, i32
  }
  func.func @transform_3(%arg0: i32) -> (i32, i32) {
    %c0_i32 = arith.constant 0 : i32
    %c0_i32_0 = arith.constant 0 : i32
    %c0_i32_1 = arith.constant 0 : i32
    return %c0_i32, %c0_i32_0 : i32, i32
  }
  func.func @transform_4(%arg0: i32) -> (i32, i32) {
    %c0_i32 = arith.constant 0 : i32
    %c0_i32_0 = arith.constant 0 : i32
    %c0_i32_1 = arith.constant 0 : i32
    return %c0_i32, %c0_i32_0 : i32, i32
  }
}

module attributes {stable_mosaic.version = 11 : i64} {
  func.func @kernel(%arg0: i32, %arg1: memref<256x128xf32, #tpu.memory_space<vmem>>, %arg2: memref<1x128xf32, #tpu.memory_space<vmem>>, %arg3: memref<1x128xf32, #tpu.memory_space<vmem>>, %arg4: memref<256x128xf32, #tpu.memory_space<vmem>>) attributes {dimension_semantics = [#tpu.dimension_semantics<parallel>], iteration_bounds = array<i64: 2>, scalar_prefetch = 0 : i64, scratch_operands = 0 : i64, tpu.core_type = #tpu.core_type<tc>, window_params = [{transform_indices = @transform_0, window_bounds = array<i64: 256, 128>}, {pipeline_mode = #tpu.pipeline_mode<synchronous>, transform_indices = @transform_1, window_bounds = array<i64: 1, 128>}, {pipeline_mode = #tpu.pipeline_mode<synchronous>, transform_indices = @transform_2, window_bounds = array<i64: 1, 128>}, {transform_indices = @transform_3, window_bounds = array<i64: 256, 128>}]} {
    %c0 = arith.constant 0 : index
    %c0_0 = arith.constant 0 : index
    %0 = vector.load %arg1[%c0, %c0_0] : memref<256x128xf32, #tpu.memory_space<vmem>>, vector<256x128xf32>
    %c0_1 = arith.constant 0 : index
    %c0_2 = arith.constant 0 : index
    %1 = vector.load %arg2[%c0_1, %c0_2] : memref<1x128xf32, #tpu.memory_space<vmem>>, vector<1x128xf32>
    %2 = vector.broadcast %1 : vector<1x128xf32> to vector<256x128xf32>
    %3 = arith.mulf %0, %2 : vector<256x128xf32>
    %c0_3 = arith.constant 0 : index
    %c0_4 = arith.constant 0 : index
    %4 = vector.load %arg3[%c0_3, %c0_4] : memref<1x128xf32, #tpu.memory_space<vmem>>, vector<1x128xf32>
    %5 = vector.broadcast %4 : vector<1x128xf32> to vector<256x128xf32>
    %6 = arith.addf %3, %5 : vector<256x128xf32>
    %cst = arith.constant 0.000000e+00 : f32
    %7 = vector.broadcast %cst : f32 to vector<256x128xf32>
    %8 = arith.maximumf %6, %7 : vector<256x128xf32>
    %c0_5 = arith.constant 0 : index
    %c0_6 = arith.constant 0 : index
    %9 = vector.load %arg4[%c0_5, %c0_6] : memref<256x128xf32, #tpu.memory_space<vmem>>, vector<256x128xf32>
    tpu.vector_store %arg4[%c0_5, %c0_6], %8 {strides = array<i32>} : memref<256x128xf32, #tpu.memory_space<vmem>>, vector<256x128xf32>,
    return
  }
  func.func @transform_0(%arg0: i32) -> (i32, i32) {
    %c0_i32 = arith.constant 0 : i32
    %c0_i32_0 = arith.constant 0 : i32
    return %arg0, %c0_i32 : i32, i32
  }
  func.func @transform_1(%arg0: i32) -> (i32, i32) {
    %c0_i32 = arith.constant 0 : i32
    %c0_i32_0 = arith.constant 0 : i32
    %c0_i32_1 = arith.constant 0 : i32
    return %c0_i32, %c0_i32_0 : i32, i32
  }
  func.func @transform_2(%arg0: i32) -> (i32, i32) {
    %c0_i32 = arith.constant 0 : i32
    %c0_i32_0 = arith.constant 0 : i32
    %c0_i32_1 = arith.constant 0 : i32
    return %c0_i32, %c0_i32_0 : i32, i32
  }
  func.func @transform_3(%arg0: i32) -> (i32, i32) {
    %c0_i32 = arith.constant 0 : i32
    %c0_i32_0 = arith.constant 0 : i32
    return %arg0, %c0_i32 : i32, i32
  }
}

module attributes {stable_mosaic.version = 11 : i64} {
  func.func @_matmul_stats_kernel(%arg0: i32, %arg1: memref<256x72xf32, #tpu.memory_space<vmem>>, %arg2: memref<72x128xf32, #tpu.memory_space<vmem>>, %arg3: memref<256x128xf32, #tpu.memory_space<vmem>>, %arg4: memref<1x128xf32, #tpu.memory_space<vmem>>, %arg5: memref<1x128xf32, #tpu.memory_space<vmem>>) attributes {dimension_semantics = [#tpu.dimension_semantics<arbitrary>], iteration_bounds = array<i64: 2>, scalar_prefetch = 0 : i64, scratch_operands = 0 : i64, tpu.core_type = #tpu.core_type<tc>, window_params = [{transform_indices = @transform_0, window_bounds = array<i64: 256, 72>}, {pipeline_mode = #tpu.pipeline_mode<synchronous>, transform_indices = @transform_1, window_bounds = array<i64: 72, 128>}, {transform_indices = @transform_2, window_bounds = array<i64: 256, 128>}, {pipeline_mode = #tpu.pipeline_mode<synchronous>, transform_indices = @transform_3, window_bounds = array<i64: 1, 128>}, {pipeline_mode = #tpu.pipeline_mode<synchronous>, transform_indices = @transform_4, window_bounds = array<i64: 1, 128>}]} {
    %c0_i32 = arith.constant 0 : i32
    %0 = arith.cmpi eq, %arg0, %c0_i32 : i32
    %1 = arith.extui %0 : i1 to i32
    %c0_i32_0 = arith.constant 0 : i32
    %2 = arith.cmpi ne, %1, %c0_i32_0 : i32
    scf.if %2 {
      %cst_16 = arith.constant 0.000000e+00 : f32
      %18 = vector.broadcast %cst_16 : f32 to vector<1x128xf32>
      %c0_17 = arith.constant 0 : index
      %c0_18 = arith.constant 0 : index
      %19 = vector.load %arg4[%c0_17, %c0_18] : memref<1x128xf32, #tpu.memory_space<vmem>>, vector<1x128xf32>
      tpu.vector_store %arg4[%c0_17, %c0_18], %18 {strides = array<i32>} : memref<1x128xf32, #tpu.memory_space<vmem>>, vector<1x128xf32>,
      %cst_19 = arith.constant 0.000000e+00 : f32
      %20 = vector.broadcast %cst_19 : f32 to vector<1x128xf32>
      %c0_20 = arith.constant 0 : index
      %c0_21 = arith.constant 0 : index
      %21 = vector.load %arg5[%c0_20, %c0_21] : memref<1x128xf32, #tpu.memory_space<vmem>>, vector<1x128xf32>
      tpu.vector_store %arg5[%c0_20, %c0_21], %20 {strides = array<i32>} : memref<1x128xf32, #tpu.memory_space<vmem>>, vector<1x128xf32>,
    } else {
    }
    %c0 = arith.constant 0 : index
    %c0_1 = arith.constant 0 : index
    %3 = vector.load %arg1[%c0, %c0_1] : memref<256x72xf32, #tpu.memory_space<vmem>>, vector<256x72xf32>
    %c0_2 = arith.constant 0 : index
    %c0_3 = arith.constant 0 : index
    %4 = vector.load %arg2[%c0_2, %c0_3] : memref<72x128xf32, #tpu.memory_space<vmem>>, vector<72x128xf32>
    %cst = arith.constant dense<0.000000e+00> : vector<256x128xf32>
    %5 = tpu.matmul %3, %4, %cst {dimension_numbers = #tpu.dot_dimension_numbers<[1], [0], [0], [1], [0, 0, 1, 1], [], []>} : vector<256x72xf32>, vector<72x128xf32>, vector<256x128xf32> -> vector<256x128xf32>
    %c0_4 = arith.constant 0 : index
    %c0_5 = arith.constant 0 : index
    %6 = vector.load %arg3[%c0_4, %c0_5] : memref<256x128xf32, #tpu.memory_space<vmem>>, vector<256x128xf32>
    tpu.vector_store %arg3[%c0_4, %c0_5], %5 {strides = array<i32>} : memref<256x128xf32, #tpu.memory_space<vmem>>, vector<256x128xf32>,
    %c0_6 = arith.constant 0 : index
    %c0_7 = arith.constant 0 : index
    %7 = vector.load %arg4[%c0_6, %c0_7] : memref<1x128xf32, #tpu.memory_space<vmem>>, vector<1x128xf32>
    %cst_8 = arith.constant dense<0.000000e+00> : vector<128xf32>
    %8 = vector.multi_reduction <add>, %5, %cst_8 [0] : vector<256x128xf32> to vector<128xf32>
    %9 = vector.shape_cast %8 : vector<128xf32> to vector<1x128xf32>
    %10 = arith.addf %7, %9 : vector<1x128xf32>
    %c0_9 = arith.constant 0 : index
    %c0_10 = arith.constant 0 : index
    %11 = vector.load %arg4[%c0_9, %c0_10] : memref<1x128xf32, #tpu.memory_space<vmem>>, vector<1x128xf32>
    tpu.vector_store %arg4[%c0_9, %c0_10], %10 {strides = array<i32>} : memref<1x128xf32, #tpu.memory_space<vmem>>, vector<1x128xf32>,
    %c0_11 = arith.constant 0 : index
    %c0_12 = arith.constant 0 : index
    %12 = vector.load %arg5[%c0_11, %c0_12] : memref<1x128xf32, #tpu.memory_space<vmem>>, vector<1x128xf32>
    %13 = arith.mulf %5, %5 : vector<256x128xf32>
    %cst_13 = arith.constant dense<0.000000e+00> : vector<128xf32>
    %14 = vector.multi_reduction <add>, %13, %cst_13 [0] : vector<256x128xf32> to vector<128xf32>
    %15 = vector.shape_cast %14 : vector<128xf32> to vector<1x128xf32>
    %16 = arith.addf %12, %15 : vector<1x128xf32>
    %c0_14 = arith.constant 0 : index
    %c0_15 = arith.constant 0 : index
    %17 = vector.load %arg5[%c0_14, %c0_15] : memref<1x128xf32, #tpu.memory_space<vmem>>, vector<1x128xf32>
    tpu.vector_store %arg5[%c0_14, %c0_15], %16 {strides = array<i32>} : memref<1x128xf32, #tpu.memory_space<vmem>>, vector<1x128xf32>,
    return
  }
  func.func @transform_0(%arg0: i32) -> (i32, i32) {
    %c0_i32 = arith.constant 0 : i32
    %c0_i32_0 = arith.constant 0 : i32
    return %arg0, %c0_i32 : i32, i32
  }
  func.func @transform_1(%arg0: i32) -> (i32, i32) {
    %c0_i32 = arith.constant 0 : i32
    %c0_i32_0 = arith.constant 0 : i32
    %c0_i32_1 = arith.constant 0 : i32
    return %c0_i32, %c0_i32_0 : i32, i32
  }
  func.func @transform_2(%arg0: i32) -> (i32, i32) {
    %c0_i32 = arith.constant 0 : i32
    %c0_i32_0 = arith.constant 0 : i32
    return %arg0, %c0_i32 : i32, i32
  }
  func.func @transform_3(%arg0: i32) -> (i32, i32) {
    %c0_i32 = arith.constant 0 : i32
    %c0_i32_0 = arith.constant 0 : i32
    %c0_i32_1 = arith.constant 0 : i32
    return %c0_i32, %c0_i32_0 : i32, i32
  }
  func.func @transform_4(%arg0: i32) -> (i32, i32) {
    %c0_i32 = arith.constant 0 : i32
    %c0_i32_0 = arith.constant 0 : i32
    %c0_i32_1 = arith.constant 0 : i32
    return %c0_i32, %c0_i32_0 : i32, i32
  }
}

module attributes {stable_mosaic.version = 11 : i64} {
  func.func @kernel(%arg0: i32, %arg1: memref<256x128xf32, #tpu.memory_space<vmem>>, %arg2: memref<1x128xf32, #tpu.memory_space<vmem>>, %arg3: memref<1x128xf32, #tpu.memory_space<vmem>>, %arg4: memref<256x128xf32, #tpu.memory_space<vmem>>, %arg5: memref<256x128xf32, #tpu.memory_space<vmem>>) attributes {dimension_semantics = [#tpu.dimension_semantics<parallel>], iteration_bounds = array<i64: 2>, scalar_prefetch = 0 : i64, scratch_operands = 0 : i64, tpu.core_type = #tpu.core_type<tc>, window_params = [{transform_indices = @transform_0, window_bounds = array<i64: 256, 128>}, {pipeline_mode = #tpu.pipeline_mode<synchronous>, transform_indices = @transform_1, window_bounds = array<i64: 1, 128>}, {pipeline_mode = #tpu.pipeline_mode<synchronous>, transform_indices = @transform_2, window_bounds = array<i64: 1, 128>}, {transform_indices = @transform_3, window_bounds = array<i64: 256, 128>}, {transform_indices = @transform_4, window_bounds = array<i64: 256, 128>}]} {
    %c0 = arith.constant 0 : index
    %c0_0 = arith.constant 0 : index
    %0 = vector.load %arg1[%c0, %c0_0] : memref<256x128xf32, #tpu.memory_space<vmem>>, vector<256x128xf32>
    %c0_1 = arith.constant 0 : index
    %c0_2 = arith.constant 0 : index
    %1 = vector.load %arg2[%c0_1, %c0_2] : memref<1x128xf32, #tpu.memory_space<vmem>>, vector<1x128xf32>
    %2 = vector.broadcast %1 : vector<1x128xf32> to vector<256x128xf32>
    %3 = arith.mulf %0, %2 : vector<256x128xf32>
    %c0_3 = arith.constant 0 : index
    %c0_4 = arith.constant 0 : index
    %4 = vector.load %arg3[%c0_3, %c0_4] : memref<1x128xf32, #tpu.memory_space<vmem>>, vector<1x128xf32>
    %5 = vector.broadcast %4 : vector<1x128xf32> to vector<256x128xf32>
    %6 = arith.addf %3, %5 : vector<256x128xf32>
    %c0_5 = arith.constant 0 : index
    %c0_6 = arith.constant 0 : index
    %7 = vector.load %arg4[%c0_5, %c0_6] : memref<256x128xf32, #tpu.memory_space<vmem>>, vector<256x128xf32>
    %8 = arith.addf %6, %7 : vector<256x128xf32>
    %cst = arith.constant 0.000000e+00 : f32
    %9 = vector.broadcast %cst : f32 to vector<256x128xf32>
    %10 = arith.maximumf %8, %9 : vector<256x128xf32>
    %c0_7 = arith.constant 0 : index
    %c0_8 = arith.constant 0 : index
    %11 = vector.load %arg5[%c0_7, %c0_8] : memref<256x128xf32, #tpu.memory_space<vmem>>, vector<256x128xf32>
    tpu.vector_store %arg5[%c0_7, %c0_8], %10 {strides = array<i32>} : memref<256x128xf32, #tpu.memory_space<vmem>>, vector<256x128xf32>,
    return
  }
  func.func @transform_0(%arg0: i32) -> (i32, i32) {
    %c0_i32 = arith.constant 0 : i32
    %c0_i32_0 = arith.constant 0 : i32
    return %arg0, %c0_i32 : i32, i32
  }
  func.func @transform_1(%arg0: i32) -> (i32, i32) {
    %c0_i32 = arith.constant 0 : i32
    %c0_i32_0 = arith.constant 0 : i32
    %c0_i32_1 = arith.constant 0 : i32
    return %c0_i32, %c0_i32_0 : i32, i32
  }
  func.func @transform_2(%arg0: i32) -> (i32, i32) {
    %c0_i32 = arith.constant 0 : i32
    %c0_i32_0 = arith.constant 0 : i32
    %c0_i32_1 = arith.constant 0 : i32
    return %c0_i32, %c0_i32_0 : i32, i32
  }
  func.func @transform_3(%arg0: i32) -> (i32, i32) {
    %c0_i32 = arith.constant 0 : i32
    %c0_i32_0 = arith.constant 0 : i32
    return %arg0, %c0_i32 : i32, i32
  }
  func.func @transform_4(%arg0: i32) -> (i32, i32) {
    %c0_i32 = arith.constant 0 : i32
    %c0_i32_0 = arith.constant 0 : i32
    return %arg0, %c0_i32 : i32, i32
  }
}

</mosaic_0001>

<llo_original>
// kernel: a_call__.5
$region0: #{a_call__.5}
  #allocation0 [shape = 'u32[]', space=smem, size = 0x4, offset = 0x4, fixed_abs, tag = 'smem constant byte address 0x4 - core index']
  #allocation1 [shape = 'u32[144,128]{1,0:T(1,128)}', space=vmem, size = 0x12000, scoped, tag = 'internal scratch']
  %s0 = inlined_call_operand.vmem [shape: f32[512,128], index: 0, kind: input, shape index: {}]
  %s1 = inlined_call_operand.vmem [shape: f32[1,128], index: 1, kind: input, shape index: {}]
  %s2 = inlined_call_operand.vmem [shape: f32[1,128], index: 2, kind: input, shape index: {}]
  %s3 = inlined_call_operand.vmem [shape: f32[512,128], index: 3, kind: output, shape index: {}]
  %s4 = sld [smem:[#allocation0]]
  $region45: #{a_call__.5} parent=0
    _
  %s6 = ssub.s32 1, %s4
  %s7 = scalar_select 0, %s6, %s4
  loop: start=0, step=1, limit=4
  $region2: #{a_call__.5} parent=0 // loop_pre_header
    _
  $region3: #{a_call__.5} parent=0 // loop_header
    %s9 = sphi 0, %s13
    %p10 = scmp.ge.s32.totalorder %s9, 4
    %s19 = sphi 0, %s21
    %s22 = sphi 0, %s19
    %s23 = sphi 0, %s22
    %s39 = sphi 0, %s23
    %s43 = sphi 0, %s43
    %s45 = sphi 0, %s43
    %s46 = sphi 0, %s45
    %s60 = sphi 0, %s46
    %s64 = sphi 0, %s64
    %s66 = sphi 0, %s64
    %s67 = sphi 0, %s66
    %s81 = sphi 0, %s67
    %s87 = sphi 0, %s89
    %s90 = sphi 0, %s87
    %s91 = sphi 0, %s90
    %s107 = sphi 0, %s91
  $region4: #{a_call__.5} parent=0 // loop_header_branch
    %12 = sbr.rel (%p10) target = $region8
  $region5: #{a_call__.5} parent=0 // loop_body
    %s14 = ssub.s32 %s9, 1
    %s15 = ssub.s32 %s9, 2
    %s16 = sadd.s32 %s9, 1
    %s17 = ssub.s32 %s9, %s16
    %p18 = scmp.eq.s32.totalorder %s17, 0
    %s20 = sadd.s32 %s19, 1
    %s21 = scalar_select %p18, %s19, %s20
    %p24 = pneg %p18
    %p25 = scmp.eq.s32.totalorder %s9, 1
    %p26 = por %p24, %p25
    %p27 = scmp.ne.s32.totalorder %s19, %s22
    %p28 = scmp.eq.s32.totalorder %s9, 0
    %p29 = por %p27, %p28
    %p30 = scmp.ne.s32.totalorder %s19, %s22
    %p31 = scmp.eq.s32.totalorder %s14, 1
    %p32 = por %p30, %p31
    %p33 = scmp.ne.s32.totalorder %s22, %s23
    %p34 = scmp.eq.s32.totalorder %s14, 0
    %p35 = por %p33, %p34
    %p36 = scmp.ne.s32.totalorder %s22, %s23
    %p37 = scmp.eq.s32.totalorder %s15, 1
    %p38 = por %p36, %p37
    %p40 = scmp.ne.s32.totalorder %s23, %s39
    %p41 = scmp.eq.s32.totalorder %s15, 0
    %p42 = por %p40, %p41
    %s44 = sadd.s32 %s43, 1
    %p47 = scmp.eq.s32.totalorder %s9, 1
    %p48 = scmp.ne.s32.totalorder %s43, %s45
    %p49 = scmp.eq.s32.totalorder %s9, 0
    %p50 = por %p48, %p49
    %p51 = scmp.ne.s32.totalorder %s43, %s45
    %p52 = scmp.eq.s32.totalorder %s14, 1
    %p53 = por %p51, %p52
    %p54 = scmp.ne.s32.totalorder %s45, %s46
    %p55 = scmp.eq.s32.totalorder %s14, 0
    %p56 = por %p54, %p55
    %p57 = scmp.ne.s32.totalorder %s45, %s46
    %p58 = scmp.eq.s32.totalorder %s15, 1
    %p59 = por %p57, %p58
    %p61 = scmp.ne.s32.totalorder %s46, %s60
    %p62 = scmp.eq.s32.totalorder %s15, 0
    %p63 = por %p61, %p62
    %s65 = sadd.s32 %s64, 1
    %p68 = scmp.eq.s32.totalorder %s9, 1
    %p69 = scmp.ne.s32.totalorder %s64, %s66
    %p70 = scmp.eq.s32.totalorder %s9, 0
    %p71 = por %p69, %p70
    %p72 = scmp.ne.s32.totalorder %s64, %s66
    %p73 = scmp.eq.s32.totalorder %s14, 1
    %p74 = por %p72, %p73
    %p75 = scmp.ne.s32.totalorder %s66, %s67
    %p76 = scmp.eq.s32.totalorder %s14, 0
    %p77 = por %p75, %p76
    %p78 = scmp.ne.s32.totalorder %s66, %s67
    %p79 = scmp.eq.s32.totalorder %s15, 1
    %p80 = por %p78, %p79
    %p82 = scmp.ne.s32.totalorder %s67, %s81
    %p83 = scmp.eq.s32.totalorder %s15, 0
    %p84 = por %p82, %p83
    %s85 = ssub.s32 %s9, %s16
    %p86 = scmp.eq.s32.totalorder %s85, 0
    %s88 = sadd.s32 %s87, 1
    %s89 = scalar_select %p86, %s87, %s88
    %p92 = pneg %p86
    %p93 = scmp.eq.s32.totalorder %s9, 1
    %p94 = por %p92, %p93
    %p95 = scmp.ne.s32.totalorder %s87, %s90
    %p96 = scmp.eq.s32.totalorder %s9, 0
    %p97 = por %p95, %p96
    %p98 = scmp.ne.s32.totalorder %s87, %s90
    %p99 = scmp.eq.s32.totalorder %s14, 1
    %p100 = por %p98, %p99
    %p101 = scmp.ne.s32.totalorder %s90, %s91
    %p102 = scmp.eq.s32.totalorder %s14, 0
    %p103 = por %p101, %p102
    %p104 = scmp.ne.s32.totalorder %s90, %s91
    %p105 = scmp.eq.s32.totalorder %s15, 1
    %p106 = por %p104, %p105
    %p108 = scmp.ne.s32.totalorder %s91, %s107
    %p109 = scmp.eq.s32.totalorder %s15, 0
    %p110 = por %p108, %p109
    %p111 = scmp.le.s32.totalorder 1, %s9
    %p112 = scmp.lt.s32.totalorder %s9, 3
    %p113 = pnand %p111, %p112
    %p114 = pneg %p113
    // Predicated region
    $region9: #{a_call__.5} parent=5 // pred_check
      _
    $region10: #{a_call__.5} parent=5 // pred_check_branch
      %116 = sbr.rel (%p113) target = $region12
    $region11: #{a_call__.5} parent=5 // pred_region
      %s117 = ssub.s32 %s9, 1
      // Predicated region
      $region13: #{a_call__.5} parent=11 // pred_check
        %p118 = pneg %p56
      $region14: #{a_call__.5} parent=11 // pred_check_branch
        %120 = sbr.rel (%p118) target = $region16
      $region15: #{a_call__.5} parent=11 // pred_region
        _
      $region16: #{a_call__.5} parent=11 // pred_fallthru
        _
      // Predicated region
      $region17: #{a_call__.5} parent=11 // pred_check
        %p121 = pneg %p77
      $region18: #{a_call__.5} parent=11 // pred_check_branch
        %123 = sbr.rel (%p121) target = $region20
      $region19: #{a_call__.5} parent=11 // pred_region
        _
      $region20: #{a_call__.5} parent=11 // pred_fallthru
        _
    $region12: #{a_call__.5} parent=5 // pred_fallthru
      _
    %p124 = scmp.lt.s32.totalorder %s9, 2
    // Predicated region
    $region21: #{a_call__.5} parent=5 // pred_check
      %p125 = pneg %p124
    $region22: #{a_call__.5} parent=5 // pred_check_branch
      %127 = sbr.rel (%p125) target = $region24
    $region23: #{a_call__.5} parent=5 // pred_region
      // Predicated region
      $region25: #{a_call__.5} parent=23 // pred_check
        %p128 = pneg %p29
      $region26: #{a_call__.5} parent=23 // pred_check_branch
        %130 = sbr.rel (%p128) target = $region28
      $region27: #{a_call__.5} parent=23 // pred_region
        %s131 = smul.u32 32, %s9
        %p132 = scmp.lt.s32.totalorder %s131, 63
        %s133 = scalar_select %p132, %s131, 63
        %s134 = smul.addr %s133, 8
        %s135 = scalar_lea.vmem %s0, %s134
        %s136 = smul.u32 32, %s9
      $region28: #{a_call__.5} parent=23 // pred_fallthru
        _
    $region24: #{a_call__.5} parent=5 // pred_fallthru
      _
    %p137 = scmp.le.s32.totalorder 1, %s9
    %p138 = scmp.lt.s32.totalorder %s9, 3
    %p139 = pnand %p137, %p138
    %p140 = pneg %p139
    // Predicated region
    $region29: #{a_call__.5} parent=5 // pred_check
      _
    $region30: #{a_call__.5} parent=5 // pred_check_branch
      %142 = sbr.rel (%p139) target = $region32
    $region31: #{a_call__.5} parent=5 // pred_region
      %s143 = ssub.s32 %s9, 1
      %s144 = smul.u32 32, %s14
      %p145 = scmp.lt.s32.totalorder %s144, 63
      %s146 = scalar_select %p145, %s144, 63
      %s147 = smul.addr %s146, 8
      %s148 = scalar_lea.vmem %s0, %s147
      %p149 = pneg %p35
      %p150 = pneg %p32
      %p151 = pneg %p56
      %p152 = pneg %p53
      %p153 = pneg %p77
      %p154 = pneg %p74
      %p155 = pneg %p103
      %p156 = pneg %p100
      %s157 = smul.u32 32, %s14
      %p158 = scmp.lt.s32.totalorder %s157, 63
      %s159 = scalar_select %p158, %s157, 63
      %s160 = smul.addr %s159, 8
      %s161 = scalar_lea.vmem %s3, %s160
      %s162 = smul.u32 32, %s14
      %p163 = scmp.lt.s32.totalorder %s162, 63
      %s164 = scalar_select %p163, %s162, 63
      %s165 = smul.addr %s164, 8
      %s166 = scalar_lea.vmem %s0, %s165
      %s167 = smul.u32 32, %s14
      %s168 = smul.u32 32, %s14
      %p169 = scmp.lt.s32.totalorder %s168, 63
      %s170 = scalar_select %p169, %s168, 63
      %s171 = smul.addr %s170, 8
      %s172 = scalar_lea.vmem %s3, %s171
      %s173 = smul.u32 32, %s14
      %v174 = vld [vmem:[%s166] sm:$0xff]
      %v175 = vld [vmem:[%s166 + $0x8] sm:$0xff]
      %v176 = vld [vmem:[%s166 + $0x10] sm:$0xff]
      %v177 = vld [vmem:[%s166 + $0x18] sm:$0xff]
      %v178 = vld [vmem:[%s166 + $0x20] sm:$0xff]
      %v179 = vld [vmem:[%s166 + $0x28] sm:$0xff]
      %v180 = vld [vmem:[%s166 + $0x30] sm:$0xff]
      %v181 = vld [vmem:[%s166 + $0x38] sm:$0xff]
      %v182 = vld [vmem:[%s166 + $0x40] sm:$0xff]
      %v183 = vld [vmem:[%s166 + $0x48] sm:$0xff]
      %v184 = vld [vmem:[%s166 + $0x50] sm:$0xff]
      %v185 = vld [vmem:[%s166 + $0x58] sm:$0xff]
      %v186 = vld [vmem:[%s166 + $0x60] sm:$0xff]
      %v187 = vld [vmem:[%s166 + $0x68] sm:$0xff]
      %v188 = vld [vmem:[%s166 + $0x70] sm:$0xff]
      %v189 = vld [vmem:[%s166 + $0x78] sm:$0xff]
      %v190 = vld [vmem:[%s166 + $0x80] sm:$0xff]
      %v191 = vld [vmem:[%s166 + $0x88] sm:$0xff]
      %v192 = vld [vmem:[%s166 + $0x90] sm:$0xff]
      %v193 = vld [vmem:[%s166 + $0x98] sm:$0xff]
      %v194 = vld [vmem:[%s166 + $0xa0] sm:$0xff]
      %v195 = vld [vmem:[%s166 + $0xa8] sm:$0xff]
      %v196 = vld [vmem:[%s166 + $0xb0] sm:$0xff]
      %v197 = vld [vmem:[%s166 + $0xb8] sm:$0xff]
      %v198 = vld [vmem:[%s166 + $0xc0] sm:$0xff]
      %v199 = vld [vmem:[%s166 + $0xc8] sm:$0xff]
      %v200 = vld [vmem:[%s166 + $0xd0] sm:$0xff]
      %v201 = vld [vmem:[%s166 + $0xd8] sm:$0xff]
      %v202 = vld [vmem:[%s166 + $0xe0] sm:$0xff]
      %v203 = vld [vmem:[%s166 + $0xe8] sm:$0xff]
      %v204 = vld [vmem:[%s166 + $0xf0] sm:$0xff]
      %v205 = vld [vmem:[%s166 + $0xf8] sm:$0xff]
      %v206 = vld [vmem:[%s1] sm:$0x1]
      %v208 = vlaneseq
      %v209 = vshrl.u32 %v208, 7
      %v210 = vsub.s32 0, %v209
      %v211 = vrot.slane %v206, %v210
      %v213 = vmul.f32 %v174, %v211
      %v214 = vmul.f32 %v175, %v211
      %v215 = vmul.f32 %v176, %v211
      %v216 = vmul.f32 %v177, %v211
      %v217 = vmul.f32 %v178, %v211
      %v218 = vmul.f32 %v179, %v211
      %v219 = vmul.f32 %v180, %v211
      %v220 = vmul.f32 %v181, %v211
      %v221 = vmul.f32 %v182, %v211
      %v222 = vmul.f32 %v183, %v211
      %v223 = vmul.f32 %v184, %v211
      %v224 = vmul.f32 %v185, %v211
      %v225 = vmul.f32 %v186, %v211
      %v226 = vmul.f32 %v187, %v211
      %v227 = vmul.f32 %v188, %v211
      %v228 = vmul.f32 %v189, %v211
      %v229 = vmul.f32 %v190, %v211
      %v230 = vmul.f32 %v191, %v211
      %v231 = vmul.f32 %v192, %v211
      %v232 = vmul.f32 %v193, %v211
      %v233 = vmul.f32 %v194, %v211
      %v234 = vmul.f32 %v195, %v211
      %v235 = vmul.f32 %v196, %v211
      %v236 = vmul.f32 %v197, %v211
      %v237 = vmul.f32 %v198, %v211
      %v238 = vmul.f32 %v199, %v211
      %v239 = vmul.f32 %v200, %v211
      %v240 = vmul.f32 %v201, %v211
      %v241 = vmul.f32 %v202, %v211
      %v242 = vmul.f32 %v203, %v211
      %v243 = vmul.f32 %v204, %v211
      %v244 = vmul.f32 %v205, %v211
      %v245 = vld [vmem:[%s2] sm:$0x1]
      %v247 = vlaneseq
      %v248 = vshrl.u32 %v247, 7
      %v249 = vsub.s32 0, %v248
      %v250 = vrot.slane %v245, %v249
      %v252 = vadd.f32 %v213, %v250
      %v253 = vadd.f32 %v214, %v250
      %v254 = vadd.f32 %v215, %v250
      %v255 = vadd.f32 %v216, %v250
      %v256 = vadd.f32 %v217, %v250
      %v257 = vadd.f32 %v218, %v250
      %v258 = vadd.f32 %v219, %v250
      %v259 = vadd.f32 %v220, %v250
      %v260 = vadd.f32 %v221, %v250
      %v261 = vadd.f32 %v222, %v250
      %v262 = vadd.f32 %v223, %v250
      %v263 = vadd.f32 %v224, %v250
      %v264 = vadd.f32 %v225, %v250
      %v265 = vadd.f32 %v226, %v250
      %v266 = vadd.f32 %v227, %v250
      %v267 = vadd.f32 %v228, %v250
      %v268 = vadd.f32 %v229, %v250
      %v269 = vadd.f32 %v230, %v250
      %v270 = vadd.f32 %v231, %v250
      %v271 = vadd.f32 %v232, %v250
      %v272 = vadd.f32 %v233, %v250
      %v273 = vadd.f32 %v234, %v250
      %v274 = vadd.f32 %v235, %v250
      %v275 = vadd.f32 %v236, %v250
      %v276 = vadd.f32 %v237, %v250
      %v277 = vadd.f32 %v238, %v250
      %v278 = vadd.f32 %v239, %v250
      %v279 = vadd.f32 %v240, %v250
      %v280 = vadd.f32 %v241, %v250
      %v281 = vadd.f32 %v242, %v250
      %v282 = vadd.f32 %v243, %v250
      %v283 = vadd.f32 %v244, %v250
      %v284 = vmax.f32 %v252, 0.0
      %v285 = vmax.f32 %v253, 0.0
      %v286 = vmax.f32 %v254, 0.0
      %v287 = vmax.f32 %v255, 0.0
      %v288 = vmax.f32 %v256, 0.0
      %v289 = vmax.f32 %v257, 0.0
      %v290 = vmax.f32 %v258, 0.0
      %v291 = vmax.f32 %v259, 0.0
      %v292 = vmax.f32 %v260, 0.0
      %v293 = vmax.f32 %v261, 0.0
      %v294 = vmax.f32 %v262, 0.0
      %v295 = vmax.f32 %v263, 0.0
      %v296 = vmax.f32 %v264, 0.0
      %v297 = vmax.f32 %v265, 0.0
      %v298 = vmax.f32 %v266, 0.0
      %v299 = vmax.f32 %v267, 0.0
      %v300 = vmax.f32 %v268, 0.0
      %v301 = vmax.f32 %v269, 0.0
      %v302 = vmax.f32 %v270, 0.0
      %v303 = vmax.f32 %v271, 0.0
      %v304 = vmax.f32 %v272, 0.0
      %v305 = vmax.f32 %v273, 0.0
      %v306 = vmax.f32 %v274, 0.0
      %v307 = vmax.f32 %v275, 0.0
      %v308 = vmax.f32 %v276, 0.0
      %v309 = vmax.f32 %v277, 0.0
      %v310 = vmax.f32 %v278, 0.0
      %v311 = vmax.f32 %v279, 0.0
      %v312 = vmax.f32 %v280, 0.0
      %v313 = vmax.f32 %v281, 0.0
      %v314 = vmax.f32 %v282, 0.0
      %v315 = vmax.f32 %v283, 0.0
      %316 = vst [vmem:[%s172] sm:$0xff] %v284
      %317 = vst [vmem:[%s172 + $0x8] sm:$0xff] %v285
      %318 = vst [vmem:[%s172 + $0x10] sm:$0xff] %v286
      %319 = vst [vmem:[%s172 + $0x18] sm:$0xff] %v287
      %320 = vst [vmem:[%s172 + $0x20] sm:$0xff] %v288
      %321 = vst [vmem:[%s172 + $0x28] sm:$0xff] %v289
      %322 = vst [vmem:[%s172 + $0x30] sm:$0xff] %v290
      %323 = vst [vmem:[%s172 + $0x38] sm:$0xff] %v291
      %324 = vst [vmem:[%s172 + $0x40] sm:$0xff] %v292
      %325 = vst [vmem:[%s172 + $0x48] sm:$0xff] %v293
      %326 = vst [vmem:[%s172 + $0x50] sm:$0xff] %v294
      %327 = vst [vmem:[%s172 + $0x58] sm:$0xff] %v295
      %328 = vst [vmem:[%s172 + $0x60] sm:$0xff] %v296
      %329 = vst [vmem:[%s172 + $0x68] sm:$0xff] %v297
      %330 = vst [vmem:[%s172 + $0x70] sm:$0xff] %v298
      %331 = vst [vmem:[%s172 + $0x78] sm:$0xff] %v299
      %332 = vst [vmem:[%s172 + $0x80] sm:$0xff] %v300
      %333 = vst [vmem:[%s172 + $0x88] sm:$0xff] %v301
      %334 = vst [vmem:[%s172 + $0x90] sm:$0xff] %v302
      %335 = vst [vmem:[%s172 + $0x98] sm:$0xff] %v303
      %336 = vst [vmem:[%s172 + $0xa0] sm:$0xff] %v304
      %337 = vst [vmem:[%s172 + $0xa8] sm:$0xff] %v305
      %338 = vst [vmem:[%s172 + $0xb0] sm:$0xff] %v306
      %339 = vst [vmem:[%s172 + $0xb8] sm:$0xff] %v307
      %340 = vst [vmem:[%s172 + $0xc0] sm:$0xff] %v308
      %341 = vst [vmem:[%s172 + $0xc8] sm:$0xff] %v309
      %342 = vst [vmem:[%s172 + $0xd0] sm:$0xff] %v310
      %343 = vst [vmem:[%s172 + $0xd8] sm:$0xff] %v311
      %344 = vst [vmem:[%s172 + $0xe0] sm:$0xff] %v312
      %345 = vst [vmem:[%s172 + $0xe8] sm:$0xff] %v313
      %346 = vst [vmem:[%s172 + $0xf0] sm:$0xff] %v314
      %347 = vst [vmem:[%s172 + $0xf8] sm:$0xff] %v315
      %s348 = smul.u32 32, %s14
      %p349 = scmp.lt.s32.totalorder %s348, 63
      %s350 = scalar_select %p349, %s348, 63
      %s351 = smul.addr %s350, 8
      %s352 = scalar_lea.vmem %s3, %s351
      // Predicated region
      $region33: #{a_call__.5} parent=31 // pred_check
        %p353 = pneg %p100
      $region34: #{a_call__.5} parent=31 // pred_check_branch
        %355 = sbr.rel (%p353) target = $region36
      $region35: #{a_call__.5} parent=31 // pred_region
        %s356 = smul.u32 32, %s14
      $region36: #{a_call__.5} parent=31 // pred_fallthru
        _
    $region32: #{a_call__.5} parent=5 // pred_fallthru
      _
    %p357 = scmp.le.s32.totalorder 2, %s9
    // Predicated region
    $region37: #{a_call__.5} parent=5 // pred_check
      %p358 = pneg %p357
    $region38: #{a_call__.5} parent=5 // pred_check_branch
      %360 = sbr.rel (%p358) target = $region40
    $region39: #{a_call__.5} parent=5 // pred_region
      %s361 = ssub.s32 %s9, 2
      // Predicated region
      $region41: #{a_call__.5} parent=39 // pred_check
        %p362 = pneg %p106
      $region42: #{a_call__.5} parent=39 // pred_check_branch
        %364 = sbr.rel (%p362) target = $region44
      $region43: #{a_call__.5} parent=39 // pred_region
        %s365 = smul.u32 32, %s15
        %p366 = scmp.lt.s32.totalorder %s365, 63
        %s367 = scalar_select %p366, %s365, 63
        %s368 = smul.addr %s367, 8
        %s369 = scalar_lea.vmem %s3, %s368
      $region44: #{a_call__.5} parent=39 // pred_fallthru
        _
    $region40: #{a_call__.5} parent=5 // pred_fallthru
      _
  $region6: #{a_call__.5} parent=0 // loop_footer
    %s13 = sadd.s32 1, %s9
  $region7: #{a_call__.5} parent=0 // loop_footer_branch
    %8 = sbr.rel target = $region3
  $region8: #{a_call__.5} parent=0 // loop_exit
    _

// kernel: a_call__.4
$region0: #{a_call__.4}
  #allocation0 [shape = 'u32[]', space=smem, size = 0x4, offset = 0x4, fixed_abs, tag = 'smem constant byte address 0x4 - core index']
  #allocation1 [shape = 'u32[144,128]{1,0:T(1,128)}', space=vmem, size = 0x12000, scoped, tag = 'internal scratch']
  %s0 = inlined_call_operand.vmem [shape: f32[512,36], index: 0, kind: input, shape index: {}]
  %s1 = inlined_call_operand.vmem [shape: f32[36,128], index: 1, kind: input, shape index: {}]
  %s2 = inlined_call_operand.vmem [shape: f32[512,128], index: 2, kind: output, shape index: {0}]
  %s3 = inlined_call_operand.vmem [shape: f32[1,128], index: 3, kind: output, shape index: {1}]
  %s4 = inlined_call_operand.vmem [shape: f32[1,128], index: 4, kind: output, shape index: {2}]
  %5 = xla_tuple %s2, %s3, %s4
  %s6 = sld [smem:[#allocation0]]
  $region61: #{a_call__.4} parent=0
    _
  %s8 = ssub.s32 1, %s6
  %s9 = scalar_select 0, %s8, %s6
  loop: start=0, step=1, limit=4
  $region2: #{a_call__.4} parent=0 // loop_pre_header
    _
  $region3: #{a_call__.4} parent=0 // loop_header
    %s11 = sphi 0, %s15
    %p12 = scmp.ge.s32.totalorder %s11, 4
    %s21 = sphi 0, %s23
    %s24 = sphi 0, %s21
    %s25 = sphi 0, %s24
    %s41 = sphi 0, %s25
    %s45 = sphi 0, %s45
    %s47 = sphi 0, %s45
    %s48 = sphi 0, %s47
    %s62 = sphi 0, %s48
    %s68 = sphi 0, %s70
    %s71 = sphi 0, %s68
    %s72 = sphi 0, %s71
    %s88 = sphi 0, %s72
    %s92 = sphi 0, %s92
    %s94 = sphi 0, %s92
    %s95 = sphi 0, %s94
    %s109 = sphi 0, %s95
    %s113 = sphi 0, %s113
    %s115 = sphi 0, %s113
    %s116 = sphi 0, %s115
    %s130 = sphi 0, %s116
  $region4: #{a_call__.4} parent=0 // loop_header_branch
    %14 = sbr.rel (%p12) target = $region8
  $region5: #{a_call__.4} parent=0 // loop_body
    %s16 = ssub.s32 %s11, 1
    %s17 = ssub.s32 %s11, 2
    %s18 = sadd.s32 %s11, 1
    %s19 = ssub.s32 %s11, %s18
    %p20 = scmp.eq.s32.totalorder %s19, 0
    %s22 = sadd.s32 %s21, 1
    %s23 = scalar_select %p20, %s21, %s22
    %p26 = pneg %p20
    %p27 = scmp.eq.s32.totalorder %s11, 1
    %p28 = por %p26, %p27
    %p29 = scmp.ne.s32.totalorder %s21, %s24
    %p30 = scmp.eq.s32.totalorder %s11, 0
    %p31 = por %p29, %p30
    %p32 = scmp.ne.s32.totalorder %s21, %s24
    %p33 = scmp.eq.s32.totalorder %s16, 1
    %p34 = por %p32, %p33
    %p35 = scmp.ne.s32.totalorder %s24, %s25
    %p36 = scmp.eq.s32.totalorder %s16, 0
    %p37 = por %p35, %p36
    %p38 = scmp.ne.s32.totalorder %s24, %s25
    %p39 = scmp.eq.s32.totalorder %s17, 1
    %p40 = por %p38, %p39
    %p42 = scmp.ne.s32.totalorder %s25, %s41
    %p43 = scmp.eq.s32.totalorder %s17, 0
    %p44 = por %p42, %p43
    %s46 = sadd.s32 %s45, 1
    %p49 = scmp.eq.s32.totalorder %s11, 1
    %p50 = scmp.ne.s32.totalorder %s45, %s47
    %p51 = scmp.eq.s32.totalorder %s11, 0
    %p52 = por %p50, %p51
    %p53 = scmp.ne.s32.totalorder %s45, %s47
    %p54 = scmp.eq.s32.totalorder %s16, 1
    %p55 = por %p53, %p54
    %p56 = scmp.ne.s32.totalorder %s47, %s48
    %p57 = scmp.eq.s32.totalorder %s16, 0
    %p58 = por %p56, %p57
    %p59 = scmp.ne.s32.totalorder %s47, %s48
    %p60 = scmp.eq.s32.totalorder %s17, 1
    %p61 = por %p59, %p60
    %p63 = scmp.ne.s32.totalorder %s48, %s62
    %p64 = scmp.eq.s32.totalorder %s17, 0
    %p65 = por %p63, %p64
    %s66 = ssub.s32 %s11, %s18
    %p67 = scmp.eq.s32.totalorder %s66, 0
    %s69 = sadd.s32 %s68, 1
    %s70 = scalar_select %p67, %s68, %s69
    %p73 = pneg %p67
    %p74 = scmp.eq.s32.totalorder %s11, 1
    %p75 = por %p73, %p74
    %p76 = scmp.ne.s32.totalorder %s68, %s71
    %p77 = scmp.eq.s32.totalorder %s11, 0
    %p78 = por %p76, %p77
    %p79 = scmp.ne.s32.totalorder %s68, %s71
    %p80 = scmp.eq.s32.totalorder %s16, 1
    %p81 = por %p79, %p80
    %p82 = scmp.ne.s32.totalorder %s71, %s72
    %p83 = scmp.eq.s32.totalorder %s16, 0
    %p84 = por %p82, %p83
    %p85 = scmp.ne.s32.totalorder %s71, %s72
    %p86 = scmp.eq.s32.totalorder %s17, 1
    %p87 = por %p85, %p86
    %p89 = scmp.ne.s32.totalorder %s72, %s88
    %p90 = scmp.eq.s32.totalorder %s17, 0
    %p91 = por %p89, %p90
    %s93 = sadd.s32 %s92, 1
    %p96 = scmp.eq.s32.totalorder %s11, 1
    %p97 = scmp.ne.s32.totalorder %s92, %s94
    %p98 = scmp.eq.s32.totalorder %s11, 0
    %p99 = por %p97, %p98
    %p100 = scmp.ne.s32.totalorder %s92, %s94
    %p101 = scmp.eq.s32.totalorder %s16, 1
    %p102 = por %p100, %p101
    %p103 = scmp.ne.s32.totalorder %s94, %s95
    %p104 = scmp.eq.s32.totalorder %s16, 0
    %p105 = por %p103, %p104
    %p106 = scmp.ne.s32.totalorder %s94, %s95
    %p107 = scmp.eq.s32.totalorder %s17, 1
    %p108 = por %p106, %p107
    %p110 = scmp.ne.s32.totalorder %s95, %s109
    %p111 = scmp.eq.s32.totalorder %s17, 0
    %p112 = por %p110, %p111
    %s114 = sadd.s32 %s113, 1
    %p117 = scmp.eq.s32.totalorder %s11, 1
    %p118 = scmp.ne.s32.totalorder %s113, %s115
    %p119 = scmp.eq.s32.totalorder %s11, 0
    %p120 = por %p118, %p119
    %p121 = scmp.ne.s32.totalorder %s113, %s115
    %p122 = scmp.eq.s32.totalorder %s16, 1
    %p123 = por %p121, %p122
    %p124 = scmp.ne.s32.totalorder %s115, %s116
    %p125 = scmp.eq.s32.totalorder %s16, 0
    %p126 = por %p124, %p125
    %p127 = scmp.ne.s32.totalorder %s115, %s116
    %p128 = scmp.eq.s32.totalorder %s17, 1
    %p129 = por %p127, %p128
    %p131 = scmp.ne.s32.totalorder %s116, %s130
    %p132 = scmp.eq.s32.totalorder %s17, 0
    %p133 = por %p131, %p132
    %p134 = scmp.le.s32.totalorder 1, %s11
    %p135 = scmp.lt.s32.totalorder %s11, 3
    %p136 = pnand %p134, %p135
    %p137 = pneg %p136
    // Predicated region
    $region9: #{a_call__.4} parent=5 // pred_check
      _
    $region10: #{a_call__.4} parent=5 // pred_check_branch
      %139 = sbr.rel (%p136) target = $region12
    $region11: #{a_call__.4} parent=5 // pred_region
      %s140 = ssub.s32 %s11, 1
      // Predicated region
      $region13: #{a_call__.4} parent=11 // pred_check
        %p141 = pneg %p58
      $region14: #{a_call__.4} parent=11 // pred_check_branch
        %143 = sbr.rel (%p141) target = $region16
      $region15: #{a_call__.4} parent=11 // pred_region
        _
      $region16: #{a_call__.4} parent=11 // pred_fallthru
        _
    $region12: #{a_call__.4} parent=5 // pred_fallthru
      _
    %p144 = scmp.lt.s32.totalorder %s11, 2
    // Predicated region
    $region17: #{a_call__.4} parent=5 // pred_check
      %p145 = pneg %p144
    $region18: #{a_call__.4} parent=5 // pred_check_branch
      %147 = sbr.rel (%p145) target = $region20
    $region19: #{a_call__.4} parent=5 // pred_region
      // Predicated region
      $region21: #{a_call__.4} parent=19 // pred_check
        %p148 = pneg %p31
      $region22: #{a_call__.4} parent=19 // pred_check_branch
        %150 = sbr.rel (%p148) target = $region24
      $region23: #{a_call__.4} parent=19 // pred_region
        %s151 = smul.u32 32, %s11
        %p152 = scmp.lt.s32.totalorder %s151, 63
        %s153 = scalar_select %p152, %s151, 63
        %s154 = smul.addr %s153, 8
        %s155 = scalar_lea.vmem %s0, %s154
        %s156 = smul.u32 32, %s11
      $region24: #{a_call__.4} parent=19 // pred_fallthru
        _
    $region20: #{a_call__.4} parent=5 // pred_fallthru
      _
    %p157 = scmp.le.s32.totalorder 1, %s11
    %p158 = scmp.lt.s32.totalorder %s11, 3
    %p159 = pnand %p157, %p158
    %p160 = pneg %p159
    // Predicated region
    $region25: #{a_call__.4} parent=5 // pred_check
      _
    $region26: #{a_call__.4} parent=5 // pred_check_branch
      %162 = sbr.rel (%p159) target = $region28
    $region27: #{a_call__.4} parent=5 // pred_region
      %s163 = ssub.s32 %s11, 1
      %s164 = smul.u32 32, %s16
      %p165 = scmp.lt.s32.totalorder %s164, 63
      %s166 = scalar_select %p165, %s164, 63
      %s167 = smul.addr %s166, 8
      %s168 = scalar_lea.vmem %s0, %s167
      %p169 = pneg %p37
      %p170 = pneg %p34
      %p171 = pneg %p58
      %p172 = pneg %p55
      %p173 = pneg %p84
      %p174 = pneg %p81
      %s175 = smul.u32 32, %s16
      %p176 = scmp.lt.s32.totalorder %s175, 63
      %s177 = scalar_select %p176, %s175, 63
      %s178 = smul.addr %s177, 8
      %s179 = scalar_lea.vmem %s2, %s178
      %p180 = pneg %p105
      %p181 = pneg %p102
      %p182 = pneg %p126
      %p183 = pneg %p123
      %s184 = smul.u32 32, %s16
      %p185 = scmp.lt.s32.totalorder %s184, 63
      %s186 = scalar_select %p185, %s184, 63
      %s187 = smul.addr %s186, 8
      %s188 = scalar_lea.vmem %s0, %s187
      %s189 = smul.u32 32, %s16
      %s190 = smul.u32 32, %s16
      %p191 = scmp.lt.s32.totalorder %s190, 63
      %s192 = scalar_select %p191, %s190, 63
      %s193 = smul.addr %s192, 8
      %s194 = scalar_lea.vmem %s2, %s193
      %s195 = smul.u32 32, %s16
      %p196 = scmp.eq.s32.totalorder %s16, 0
      // Predicated region
      $region29: #{a_call__.4} parent=27 // pred_check
        %p197 = pneg %p196
      $region30: #{a_call__.4} parent=27 // pred_check_branch
        %199 = sbr.rel (%p197) target = $region32
      $region31: #{a_call__.4} parent=27 // pred_region
        %200 = vst [vmem:[%s3] sm:$0x1] 0.0
        %201 = vst [vmem:[%s4] sm:$0x1] 0.0
      $region32: #{a_call__.4} parent=27 // pred_fallthru
        _
      %v202 = vld [vmem:[%s188] sm:$0xff]
      %v203 = vld [vmem:[%s188 + $0x8] sm:$0xff]
      %v204 = vld [vmem:[%s188 + $0x10] sm:$0xff]
      %v205 = vld [vmem:[%s188 + $0x18] sm:$0xff]
      %v206 = vld [vmem:[%s188 + $0x20] sm:$0xff]
      %v207 = vld [vmem:[%s188 + $0x28] sm:$0xff]
      %v208 = vld [vmem:[%s188 + $0x30] sm:$0xff]
      %v209 = vld [vmem:[%s188 + $0x38] sm:$0xff]
      %v210 = vld [vmem:[%s188 + $0x40] sm:$0xff]
      %v211 = vld [vmem:[%s188 + $0x48] sm:$0xff]
      %v212 = vld [vmem:[%s188 + $0x50] sm:$0xff]
      %v213 = vld [vmem:[%s188 + $0x58] sm:$0xff]
      %v214 = vld [vmem:[%s188 + $0x60] sm:$0xff]
      %v215 = vld [vmem:[%s188 + $0x68] sm:$0xff]
      %v216 = vld [vmem:[%s188 + $0x70] sm:$0xff]
      %v217 = vld [vmem:[%s188 + $0x78] sm:$0xff]
      %v218 = vld [vmem:[%s188 + $0x80] sm:$0xff]
      %v219 = vld [vmem:[%s188 + $0x88] sm:$0xff]
      %v220 = vld [vmem:[%s188 + $0x90] sm:$0xff]
      %v221 = vld [vmem:[%s188 + $0x98] sm:$0xff]
      %v222 = vld [vmem:[%s188 + $0xa0] sm:$0xff]
      %v223 = vld [vmem:[%s188 + $0xa8] sm:$0xff]
      %v224 = vld [vmem:[%s188 + $0xb0] sm:$0xff]
      %v225 = vld [vmem:[%s188 + $0xb8] sm:$0xff]
      %v226 = vld [vmem:[%s188 + $0xc0] sm:$0xff]
      %v227 = vld [vmem:[%s188 + $0xc8] sm:$0xff]
      %v228 = vld [vmem:[%s188 + $0xd0] sm:$0xff]
      %v229 = vld [vmem:[%s188 + $0xd8] sm:$0xff]
      %v230 = vld [vmem:[%s188 + $0xe0] sm:$0xff]
      %v231 = vld [vmem:[%s188 + $0xe8] sm:$0xff]
      %v232 = vld [vmem:[%s188 + $0xf0] sm:$0xff]
      %v233 = vld [vmem:[%s188 + $0xf8] sm:$0xff]
      %v234 = vld [vmem:[%s1] sm:$0xff]
      %v235 = vld [vmem:[%s1 + $0x8] sm:$0xff]
      %v236 = vld [vmem:[%s1 + $0x10] sm:$0xff]
      %v237 = vld [vmem:[%s1 + $0x18] sm:$0xff]
      %v238 = vld [vmem:[%s1 + $0x20] sm:$0xf]
      %vm239 = vcmask 293888
      %v241 = vsel %vm239, %v202, 0
      %v244 = vsel %vm239, %v203, 0
      %v247 = vsel %vm239, %v204, 0
      %v250 = vsel %vm239, %v205, 0
      %v253 = vsel %vm239, %v206, 0
      %v256 = vsel %vm239, %v207, 0
      %v259 = vsel %vm239, %v208, 0
      %v262 = vsel %vm239, %v209, 0
      %v265 = vsel %vm239, %v210, 0
      %v268 = vsel %vm239, %v211, 0
      %v271 = vsel %vm239, %v212, 0
      %v274 = vsel %vm239, %v213, 0
      %v277 = vsel %vm239, %v214, 0
      %v280 = vsel %vm239, %v215, 0
      %v283 = vsel %vm239, %v216, 0
      %v286 = vsel %vm239, %v217, 0
      %v289 = vsel %vm239, %v218, 0
      %v292 = vsel %vm239, %v219, 0
      %v295 = vsel %vm239, %v220, 0
      %v298 = vsel %vm239, %v221, 0
      %v301 = vsel %vm239, %v222, 0
      %v304 = vsel %vm239, %v223, 0
      %v307 = vsel %vm239, %v224, 0
      %v310 = vsel %vm239, %v225, 0
      %v313 = vsel %vm239, %v226, 0
      %v316 = vsel %vm239, %v227, 0
      %v319 = vsel %vm239, %v228, 0
      %v322 = vsel %vm239, %v229, 0
      %v325 = vsel %vm239, %v230, 0
      %v328 = vsel %vm239, %v231, 0
      %v331 = vsel %vm239, %v232, 0
      %v334 = vsel %vm239, %v233, 0
      %vm336 = vcmask 1043456
      %v338 = vsel %vm336, %v238, 0
      %340 = vmatprep.subr.mxu0 0.0
      %341 = vmatpush1.msra.mxu0 0.0
      %342 = vmatprep.subr.mxu0 0.0
      %343 = vmatpush1.msra.mxu0 0.0
      %344 = vmatprep.subr.mxu0 0.0
      %345 = vmatpush1.msra.mxu0 0.0
      %346 = vmatprep.subr.mxu0 0.0
      %347 = vmatpush1.msra.mxu0 0.0
      %348 = vmatprep.subr.mxu0 0.0
      %349 = vmatpush1.msra.mxu0 0.0
      %350 = vmatprep.subr.mxu0 0.0
      %351 = vmatpush1.msra.mxu0 0.0
      %352 = vmatprep.subr.mxu0 0.0
      %353 = vmatpush1.msra.mxu0 0.0
      %354 = vmatprep.subr.mxu0 0.0
      %355 = vmatpush1.msra.mxu0 0.0
      %356 = vmatprep.subr.mxu0 0.0
      %357 = vmatpush1.msra.mxu0 0.0
      %358 = vmatprep.subr.mxu0 0.0
      %359 = vmatpush1.msra.mxu0 0.0
      %360 = vmatprep.subr.mxu0 0.0
      %361 = vmatpush1.msra.mxu0 0.0
      %362 = vmatprep.subr.mxu0 0.0
      %363 = vmatpush1.msra.mxu0 %v338
      %364 = vmatprep.subr.mxu0 0.0
      %365 = vmatpush1.msra.mxu0 %v237
      %366 = vmatprep.subr.mxu0 0.0
      %367 = vmatpush1.msra.mxu0 %v236
      %368 = vmatprep.subr.mxu0 0.0
      %369 = vmatpush1.msra.mxu0 %v235
      %370 = vmatprep.subr.mxu0 0.0
      %371 = vmatpush1.msra.mxu0 %v234
      %372 = vmatprep.subr.mxu0 0.0
      %373 = vmatpush2.msra.mxu0 0.0
      %374 = vmatprep.subr.mxu0 0.0
      %375 = vmatpush2.msra.mxu0 0.0
      %376 = vmatprep.subr.mxu0 0.0
      %377 = vmatpush2.msra.mxu0 0.0
      %378 = vmatprep.subr.mxu0 0.0
      %379 = vmatpush2.msra.mxu0 0.0
      %380 = vmatprep.subr.mxu0 0.0
      %381 = vmatpush2.msra.mxu0 0.0
      %382 = vmatprep.subr.mxu0 0.0
      %383 = vmatpush2.msra.mxu0 0.0
      %384 = vmatprep.subr.mxu0 0.0
      %385 = vmatpush2.msra.mxu0 0.0
      %386 = vmatprep.subr.mxu0 0.0
      %387 = vmatpush2.msra.mxu0 0.0
      %388 = vmatprep.subr.mxu0 0.0
      %389 = vmatpush2.msra.mxu0 0.0
      %390 = vmatprep.subr.mxu0 0.0
      %391 = vmatpush2.msra.mxu0 0.0
      %392 = vmatprep.subr.mxu0 0.0
      %393 = vmatpush2.msra.mxu0 0.0
      %394 = vmatprep.subr.mxu0 0.0
      %395 = vmatpush2.msra.mxu0 0.0
      %396 = vmatprep.subr.mxu0 0.0
      %397 = vmatpush2.msra.mxu0 0.0
      %398 = vmatprep.subr.mxu0 0.0
      %399 = vmatpush2.msra.mxu0 0.0
      %400 = vmatprep.subr.mxu0 0.0
      %401 = vmatpush2.msra.mxu0 0.0
      %402 = vmatprep.subr.mxu0 0.0
      %403 = vmatpush2.msra.mxu0 0.0
      %404 = vmatprep.mubr.f32.mxu0 0.0
      %405 = vmatmul.mubr.f32.gmra.mxu0 %v241
      %v406 = vpop.f32.mrf.mxu0
      %v407 = vadd.f32 0.0, %v406
      %v408 = vpop.f32.mrf.mxu0
      %409 = vmatprep.mubr.f32.mxu0 0.0
      %410 = vmatmul.mubr.f32.gmra.mxu0 %v244
      %v411 = vpop.f32.mrf.mxu0
      %v412 = vadd.f32 0.0, %v411
      %v413 = vpop.f32.mrf.mxu0
      %414 = vmatprep.mubr.f32.mxu0 0.0
      %415 = vmatmul.mubr.f32.gmra.mxu0 %v247
      %v416 = vpop.f32.mrf.mxu0
      %v417 = vadd.f32 0.0, %v416
      %v418 = vpop.f32.mrf.mxu0
      %419 = vmatprep.mubr.f32.mxu0 0.0
      %420 = vmatmul.mubr.f32.gmra.mxu0 %v250
      %v421 = vpop.f32.mrf.mxu0
      %v422 = vadd.f32 0.0, %v421
      %v423 = vpop.f32.mrf.mxu0
      %424 = vmatprep.mubr.f32.mxu0 0.0
      %425 = vmatmul.mubr.f32.gmra.mxu0 %v253
      %v426 = vpop.f32.mrf.mxu0
      %v427 = vadd.f32 0.0, %v426
      %v428 = vpop.f32.mrf.mxu0
      %429 = vmatprep.mubr.f32.mxu0 0.0
      %430 = vmatmul.mubr.f32.gmra.mxu0 %v256
      %v431 = vpop.f32.mrf.mxu0
      %v432 = vadd.f32 0.0, %v431
      %v433 = vpop.f32.mrf.mxu0
      %434 = vmatprep.mubr.f32.mxu0 0.0
      %435 = vmatmul.mubr.f32.gmra.mxu0 %v259
      %v436 = vpop.f32.mrf.mxu0
      %v437 = vadd.f32 0.0, %v436
      %v438 = vpop.f32.mrf.mxu0
      %439 = vmatprep.mubr.f32.mxu0 0.0
      %440 = vmatmul.mubr.f32.gmra.mxu0 %v262
      %v441 = vpop.f32.mrf.mxu0
      %v442 = vadd.f32 0.0, %v441
      %v443 = vpop.f32.mrf.mxu0
      %444 = vmatprep.mubr.f32.mxu0 0.0
      %445 = vmatmul.mubr.f32.gmra.mxu0 %v265
      %v446 = vpop.f32.mrf.mxu0
      %v447 = vadd.f32 0.0, %v446
      %v448 = vpop.f32.mrf.mxu0
      %449 = vmatprep.mubr.f32.mxu0 0.0
      %450 = vmatmul.mubr.f32.gmra.mxu0 %v268
      %v451 = vpop.f32.mrf.mxu0
      %v452 = vadd.f32 0.0, %v451
      %v453 = vpop.f32.mrf.mxu0
      %454 = vmatprep.mubr.f32.mxu0 0.0
      %455 = vmatmul.mubr.f32.gmra.mxu0 %v271
      %v456 = vpop.f32.mrf.mxu0
      %v457 = vadd.f32 0.0, %v456
      %v458 = vpop.f32.mrf.mxu0
      %459 = vmatprep.mubr.f32.mxu0 0.0
      %460 = vmatmul.mubr.f32.gmra.mxu0 %v274
      %v461 = vpop.f32.mrf.mxu0
      %v462 = vadd.f32 0.0, %v461
      %v463 = vpop.f32.mrf.mxu0
      %464 = vmatprep.mubr.f32.mxu0 0.0
      %465 = vmatmul.mubr.f32.gmra.mxu0 %v277
      %v466 = vpop.f32.mrf.mxu0
      %v467 = vadd.f32 0.0, %v466
      %v468 = vpop.f32.mrf.mxu0
      %469 = vmatprep.mubr.f32.mxu0 0.0
      %470 = vmatmul.mubr.f32.gmra.mxu0 %v280
      %v471 = vpop.f32.mrf.mxu0
      %v472 = vadd.f32 0.0, %v471
      %v473 = vpop.f32.mrf.mxu0
      %474 = vmatprep.mubr.f32.mxu0 0.0
      %475 = vmatmul.mubr.f32.gmra.mxu0 %v283
      %v476 = vpop.f32.mrf.mxu0
      %v477 = vadd.f32 0.0, %v476
      %v478 = vpop.f32.mrf.mxu0
      %479 = vmatprep.mubr.f32.mxu0 0.0
      %480 = vmatmul.mubr.f32.gmra.mxu0 %v286
      %v481 = vpop.f32.mrf.mxu0
      %v482 = vadd.f32 0.0, %v481
      %v483 = vpop.f32.mrf.mxu0
      %484 = vmatprep.mubr.f32.mxu0 0.0
      %485 = vmatmul.mubr.f32.gmra.mxu0 %v289
      %v486 = vpop.f32.mrf.mxu0
      %v487 = vadd.f32 0.0, %v486
      %v488 = vpop.f32.mrf.mxu0
      %489 = vmatprep.mubr.f32.mxu0 0.0
      %490 = vmatmul.mubr.f32.gmra.mxu0 %v292
      %v491 = vpop.f32.mrf.mxu0
      %v492 = vadd.f32 0.0, %v491
      %v493 = vpop.f32.mrf.mxu0
      %494 = vmatprep.mubr.f32.mxu0 0.0
      %495 = vmatmul.mubr.f32.gmra.mxu0 %v295
      %v496 = vpop.f32.mrf.mxu0
      %v497 = vadd.f32 0.0, %v496
      %v498 = vpop.f32.mrf.mxu0
      %499 = vmatprep.mubr.f32.mxu0 0.0
      %500 = vmatmul.mubr.f32.gmra.mxu0 %v298
      %v501 = vpop.f32.mrf.mxu0
      %v502 = vadd.f32 0.0, %v501
      %v503 = vpop.f32.mrf.mxu0
      %504 = vmatprep.mubr.f32.mxu0 0.0
      %505 = vmatmul.mubr.f32.gmra.mxu0 %v301
      %v506 = vpop.f32.mrf.mxu0
      %v507 = vadd.f32 0.0, %v506
      %v508 = vpop.f32.mrf.mxu0
      %509 = vmatprep.mubr.f32.mxu0 0.0
      %510 = vmatmul.mubr.f32.gmra.mxu0 %v304
      %v511 = vpop.f32.mrf.mxu0
      %v512 = vadd.f32 0.0, %v511
      %v513 = vpop.f32.mrf.mxu0
      %514 = vmatprep.mubr.f32.mxu0 0.0
      %515 = vmatmul.mubr.f32.gmra.mxu0 %v307
      %v516 = vpop.f32.mrf.mxu0
      %v517 = vadd.f32 0.0, %v516
      %v518 = vpop.f32.mrf.mxu0
      %519 = vmatprep.mubr.f32.mxu0 0.0
      %520 = vmatmul.mubr.f32.gmra.mxu0 %v310
      %v521 = vpop.f32.mrf.mxu0
      %v522 = vadd.f32 0.0, %v521
      %v523 = vpop.f32.mrf.mxu0
      %524 = vmatprep.mubr.f32.mxu0 0.0
      %525 = vmatmul.mubr.f32.gmra.mxu0 %v313
      %v526 = vpop.f32.mrf.mxu0
      %v527 = vadd.f32 0.0, %v526
      %v528 = vpop.f32.mrf.mxu0
      %529 = vmatprep.mubr.f32.mxu0 0.0
      %530 = vmatmul.mubr.f32.gmra.mxu0 %v316
      %v531 = vpop.f32.mrf.mxu0
      %v532 = vadd.f32 0.0, %v531
      %v533 = vpop.f32.mrf.mxu0
      %534 = vmatprep.mubr.f32.mxu0 0.0
      %535 = vmatmul.mubr.f32.gmra.mxu0 %v319
      %v536 = vpop.f32.mrf.mxu0
      %v537 = vadd.f32 0.0, %v536
      %v538 = vpop.f32.mrf.mxu0
      %539 = vmatprep.mubr.f32.mxu0 0.0
      %540 = vmatmul.mubr.f32.gmra.mxu0 %v322
      %v541 = vpop.f32.mrf.mxu0
      %v542 = vadd.f32 0.0, %v541
      %v543 = vpop.f32.mrf.mxu0
      %544 = vmatprep.mubr.f32.mxu0 0.0
      %545 = vmatmul.mubr.f32.gmra.mxu0 %v325
      %v546 = vpop.f32.mrf.mxu0
      %v547 = vadd.f32 0.0, %v546
      %v548 = vpop.f32.mrf.mxu0
      %549 = vmatprep.mubr.f32.mxu0 0.0
      %550 = vmatmul.mubr.f32.gmra.mxu0 %v328
      %v551 = vpop.f32.mrf.mxu0
      %v552 = vadd.f32 0.0, %v551
      %v553 = vpop.f32.mrf.mxu0
      %554 = vmatprep.mubr.f32.mxu0 0.0
      %555 = vmatmul.mubr.f32.gmra.mxu0 %v331
      %v556 = vpop.f32.mrf.mxu0
      %v557 = vadd.f32 0.0, %v556
      %v558 = vpop.f32.mrf.mxu0
      %559 = vmatprep.mubr.f32.mxu0 0.0
      %560 = vmatmul.mubr.f32.gmra.mxu0 %v334
      %v561 = vpop.f32.mrf.mxu0
      %v562 = vadd.f32 0.0, %v561
      %v563 = vpop.f32.mrf.mxu0
      %564 = vdwg.mxu0
      %565 = vst [vmem:[%s194] sm:$0xff] %v407
      %566 = vst [vmem:[%s194 + $0x8] sm:$0xff] %v412
      %567 = vst [vmem:[%s194 + $0x10] sm:$0xff] %v417
      %568 = vst [vmem:[%s194 + $0x18] sm:$0xff] %v422
      %569 = vst [vmem:[%s194 + $0x20] sm:$0xff] %v427
      %570 = vst [vmem:[%s194 + $0x28] sm:$0xff] %v432
      %571 = vst [vmem:[%s194 + $0x30] sm:$0xff] %v437
      %572 = vst [vmem:[%s194 + $0x38] sm:$0xff] %v442
      %573 = vst [vmem:[%s194 + $0x40] sm:$0xff] %v447
      %574 = vst [vmem:[%s194 + $0x48] sm:$0xff] %v452
      %575 = vst [vmem:[%s194 + $0x50] sm:$0xff] %v457
      %576 = vst [vmem:[%s194 + $0x58] sm:$0xff] %v462
      %577 = vst [vmem:[%s194 + $0x60] sm:$0xff] %v467
      %578 = vst [vmem:[%s194 + $0x68] sm:$0xff] %v472
      %579 = vst [vmem:[%s194 + $0x70] sm:$0xff] %v477
      %580 = vst [vmem:[%s194 + $0x78] sm:$0xff] %v482
      %581 = vst [vmem:[%s194 + $0x80] sm:$0xff] %v487
      %582 = vst [vmem:[%s194 + $0x88] sm:$0xff] %v492
      %583 = vst [vmem:[%s194 + $0x90] sm:$0xff] %v497
      %584 = vst [vmem:[%s194 + $0x98] sm:$0xff] %v502
      %585 = vst [vmem:[%s194 + $0xa0] sm:$0xff] %v507
      %586 = vst [vmem:[%s194 + $0xa8] sm:$0xff] %v512
      %587 = vst [vmem:[%s194 + $0xb0] sm:$0xff] %v517
      %588 = vst [vmem:[%s194 + $0xb8] sm:$0xff] %v522
      %589 = vst [vmem:[%s194 + $0xc0] sm:$0xff] %v527
      %590 = vst [vmem:[%s194 + $0xc8] sm:$0xff] %v532
      %591 = vst [vmem:[%s194 + $0xd0] sm:$0xff] %v537
      %592 = vst [vmem:[%s194 + $0xd8] sm:$0xff] %v542
      %593 = vst [vmem:[%s194 + $0xe0] sm:$0xff] %v547
      %594 = vst [vmem:[%s194 + $0xe8] sm:$0xff] %v552
      %595 = vst [vmem:[%s194 + $0xf0] sm:$0xff] %v557
      %596 = vst [vmem:[%s194 + $0xf8] sm:$0xff] %v562
      %v597 = vld [vmem:[%s3] sm:$0x1]
      %v598 = vadd.f32 %v407, %v412
      %v599 = vadd.f32 %v598, %v417
      %v600 = vadd.f32 %v599, %v422
      %v601 = vadd.f32 %v600, %v427
      %v602 = vadd.f32 %v601, %v432
      %v603 = vadd.f32 %v602, %v437
      %v604 = vadd.f32 %v603, %v442
      %v605 = vadd.f32 %v604, %v447
      %v606 = vadd.f32 %v605, %v452
      %v607 = vadd.f32 %v606, %v457
      %v608 = vadd.f32 %v607, %v462
      %v609 = vadd.f32 %v608, %v467
      %v610 = vadd.f32 %v609, %v472
      %v611 = vadd.f32 %v610, %v477
      %v612 = vadd.f32 %v611, %v482
      %v613 = vadd.f32 %v612, %v487
      %v614 = vadd.f32 %v613, %v492
      %v615 = vadd.f32 %v614, %v497
      %v616 = vadd.f32 %v615, %v502
      %v617 = vadd.f32 %v616, %v507
      %v618 = vadd.f32 %v617, %v512
      %v619 = vadd.f32 %v618, %v517
      %v620 = vadd.f32 %v619, %v522
      %v621 = vadd.f32 %v620, %v527
      %v622 = vadd.f32 %v621, %v532
      %v623 = vadd.f32 %v622, %v537
      %v624 = vadd.f32 %v623, %v542
      %v625 = vadd.f32 %v624, %v547
      %v626 = vadd.f32 %v625, %v552
      %v627 = vadd.f32 %v626, %v557
      %v628 = vadd.f32 %v627, %v562
      %v629 = vrot.slane %v628, 4
      %v630 = vadd.f32 %v628, %v629
      %v631 = vrot.slane %v630, 2
      %v632 = vadd.f32 %v630, %v631
      %v633 = vrot.slane %v632, 1
      %v634 = vadd.f32 %v632, %v633
      %v635 = vadd.f32 %v597, %v634
      %636 = vst [vmem:[%s3] sm:$0x1] %v635
      %v637 = vld [vmem:[%s4] sm:$0x1]
      %v638 = vmul.f32 %v407, %v407
      %v639 = vmul.f32 %v412, %v412
      %v640 = vmul.f32 %v417, %v417
      %v641 = vmul.f32 %v422, %v422
      %v642 = vmul.f32 %v427, %v427
      %v643 = vmul.f32 %v432, %v432
      %v644 = vmul.f32 %v437, %v437
      %v645 = vmul.f32 %v442, %v442
      %v646 = vmul.f32 %v447, %v447
      %v647 = vmul.f32 %v452, %v452
      %v648 = vmul.f32 %v457, %v457
      %v649 = vmul.f32 %v462, %v462
      %v650 = vmul.f32 %v467, %v467
      %v651 = vmul.f32 %v472, %v472
      %v652 = vmul.f32 %v477, %v477
      %v653 = vmul.f32 %v482, %v482
      %v654 = vmul.f32 %v487, %v487
      %v655 = vmul.f32 %v492, %v492
      %v656 = vmul.f32 %v497, %v497
      %v657 = vmul.f32 %v502, %v502
      %v658 = vmul.f32 %v507, %v507
      %v659 = vmul.f32 %v512, %v512
      %v660 = vmul.f32 %v517, %v517
      %v661 = vmul.f32 %v522, %v522
      %v662 = vmul.f32 %v527, %v527
      %v663 = vmul.f32 %v532, %v532
      %v664 = vmul.f32 %v537, %v537
      %v665 = vmul.f32 %v542, %v542
      %v666 = vmul.f32 %v547, %v547
      %v667 = vmul.f32 %v552, %v552
      %v668 = vmul.f32 %v557, %v557
      %v669 = vmul.f32 %v562, %v562
      %v670 = vadd.f32 %v638, %v639
      %v671 = vadd.f32 %v670, %v640
      %v672 = vadd.f32 %v671, %v641
      %v673 = vadd.f32 %v672, %v642
      %v674 = vadd.f32 %v673, %v643
      %v675 = vadd.f32 %v674, %v644
      %v676 = vadd.f32 %v675, %v645
      %v677 = vadd.f32 %v676, %v646
      %v678 = vadd.f32 %v677, %v647
      %v679 = vadd.f32 %v678, %v648
      %v680 = vadd.f32 %v679, %v649
      %v681 = vadd.f32 %v680, %v650
      %v682 = vadd.f32 %v681, %v651
      %v683 = vadd.f32 %v682, %v652
      %v684 = vadd.f32 %v683, %v653
      %v685 = vadd.f32 %v684, %v654
      %v686 = vadd.f32 %v685, %v655
      %v687 = vadd.f32 %v686, %v656
      %v688 = vadd.f32 %v687, %v657
      %v689 = vadd.f32 %v688, %v658
      %v690 = vadd.f32 %v689, %v659
      %v691 = vadd.f32 %v690, %v660
      %v692 = vadd.f32 %v691, %v661
      %v693 = vadd.f32 %v692, %v662
      %v694 = vadd.f32 %v693, %v663
      %v695 = vadd.f32 %v694, %v664
      %v696 = vadd.f32 %v695, %v665
      %v697 = vadd.f32 %v696, %v666
      %v698 = vadd.f32 %v697, %v667
      %v699 = vadd.f32 %v698, %v668
      %v700 = vadd.f32 %v699, %v669
      %v701 = vrot.slane %v700, 4
      %v702 = vadd.f32 %v700, %v701
      %v703 = vrot.slane %v702, 2
      %v704 = vadd.f32 %v702, %v703
      %v705 = vrot.slane %v704, 1
      %v706 = vadd.f32 %v704, %v705
      %v707 = vadd.f32 %v637, %v706
      %708 = vst [vmem:[%s4] sm:$0x1] %v707
      %s709 = smul.u32 32, %s16
      %p710 = scmp.lt.s32.totalorder %s709, 63
      %s711 = scalar_select %p710, %s709, 63
      %s712 = smul.addr %s711, 8
      %s713 = scalar_lea.vmem %s2, %s712
      // Predicated region
      $region33: #{a_call__.4} parent=27 // pred_check
        %p714 = pneg %p81
      $region34: #{a_call__.4} parent=27 // pred_check_branch
        %716 = sbr.rel (%p714) target = $region36
      $region35: #{a_call__.4} parent=27 // pred_region
        %s717 = smul.u32 32, %s16
      $region36: #{a_call__.4} parent=27 // pred_fallthru
        _
      // Predicated region
      $region37: #{a_call__.4} parent=27 // pred_check
        %p718 = pneg %p102
      $region38: #{a_call__.4} parent=27 // pred_check_branch
        %720 = sbr.rel (%p718) target = $region40
      $region39: #{a_call__.4} parent=27 // pred_region
        _
      $region40: #{a_call__.4} parent=27 // pred_fallthru
        _
      // Predicated region
      $region41: #{a_call__.4} parent=27 // pred_check
        %p721 = pneg %p123
      $region42: #{a_call__.4} parent=27 // pred_check_branch
        %723 = sbr.rel (%p721) target = $region44
      $region43: #{a_call__.4} parent=27 // pred_region
        _
      $region44: #{a_call__.4} parent=27 // pred_fallthru
        _
      // Predicated region
      $region45: #{a_call__.4} parent=27 // pred_check
        %p724 = pneg %p102
      $region46: #{a_call__.4} parent=27 // pred_check_branch
        %726 = sbr.rel (%p724) target = $region48
      $region47: #{a_call__.4} parent=27 // pred_region
        _
      $region48: #{a_call__.4} parent=27 // pred_fallthru
        _
      // Predicated region
      $region49: #{a_call__.4} parent=27 // pred_check
        %p727 = pneg %p123
      $region50: #{a_call__.4} parent=27 // pred_check_branch
        %729 = sbr.rel (%p727) target = $region52
      $region51: #{a_call__.4} parent=27 // pred_region
        _
      $region52: #{a_call__.4} parent=27 // pred_fallthru
        _
    $region28: #{a_call__.4} parent=5 // pred_fallthru
      _
    %p730 = scmp.le.s32.totalorder 2, %s11
    // Predicated region
    $region53: #{a_call__.4} parent=5 // pred_check
      %p731 = pneg %p730
    $region54: #{a_call__.4} parent=5 // pred_check_branch
      %733 = sbr.rel (%p731) target = $region56
    $region55: #{a_call__.4} parent=5 // pred_region
      %s734 = ssub.s32 %s11, 2
      // Predicated region
      $region57: #{a_call__.4} parent=55 // pred_check
        %p735 = pneg %p87
      $region58: #{a_call__.4} parent=55 // pred_check_branch
        %737 = sbr.rel (%p735) target = $region60
      $region59: #{a_call__.4} parent=55 // pred_region
        %s738 = smul.u32 32, %s17
        %p739 = scmp.lt.s32.totalorder %s738, 63
        %s740 = scalar_select %p739, %s738, 63
        %s741 = smul.addr %s740, 8
        %s742 = scalar_lea.vmem %s2, %s741
      $region60: #{a_call__.4} parent=55 // pred_fallthru
        _
    $region56: #{a_call__.4} parent=5 // pred_fallthru
      _
  $region6: #{a_call__.4} parent=0 // loop_footer
    %s15 = sadd.s32 1, %s11
  $region7: #{a_call__.4} parent=0 // loop_footer_branch
    %10 = sbr.rel target = $region3
  $region8: #{a_call__.4} parent=0 // loop_exit
    _

// kernel: a_call__.6
$region0: #{a_call__.6}
  #allocation0 [shape = 'u32[]', space=smem, size = 0x4, offset = 0x4, fixed_abs, tag = 'smem constant byte address 0x4 - core index']
  #allocation1 [shape = 'u32[144,128]{1,0:T(1,128)}', space=vmem, size = 0x12000, scoped, tag = 'internal scratch']
  %s0 = inlined_call_operand.vmem [shape: f32[512,72], index: 0, kind: input, shape index: {}]
  %s1 = inlined_call_operand.vmem [shape: f32[72,128], index: 1, kind: input, shape index: {}]
  %s2 = inlined_call_operand.vmem [shape: f32[512,128], index: 2, kind: output, shape index: {0}]
  %s3 = inlined_call_operand.vmem [shape: f32[1,128], index: 3, kind: output, shape index: {1}]
  %s4 = inlined_call_operand.vmem [shape: f32[1,128], index: 4, kind: output, shape index: {2}]
  %5 = xla_tuple %s2, %s3, %s4
  %s6 = sld [smem:[#allocation0]]
  $region61: #{a_call__.6} parent=0
    _
  %s8 = ssub.s32 1, %s6
  %s9 = scalar_select 0, %s8, %s6
  loop: start=0, step=1, limit=4
  $region2: #{a_call__.6} parent=0 // loop_pre_header
    _
  $region3: #{a_call__.6} parent=0 // loop_header
    %s11 = sphi 0, %s15
    %p12 = scmp.ge.s32.totalorder %s11, 4
    %s21 = sphi 0, %s23
    %s24 = sphi 0, %s21
    %s25 = sphi 0, %s24
    %s41 = sphi 0, %s25
    %s45 = sphi 0, %s45
    %s47 = sphi 0, %s45
    %s48 = sphi 0, %s47
    %s62 = sphi 0, %s48
    %s68 = sphi 0, %s70
    %s71 = sphi 0, %s68
    %s72 = sphi 0, %s71
    %s88 = sphi 0, %s72
    %s92 = sphi 0, %s92
    %s94 = sphi 0, %s92
    %s95 = sphi 0, %s94
    %s109 = sphi 0, %s95
    %s113 = sphi 0, %s113
    %s115 = sphi 0, %s113
    %s116 = sphi 0, %s115
    %s130 = sphi 0, %s116
  $region4: #{a_call__.6} parent=0 // loop_header_branch
    %14 = sbr.rel (%p12) target = $region8
  $region5: #{a_call__.6} parent=0 // loop_body
    %s16 = ssub.s32 %s11, 1
    %s17 = ssub.s32 %s11, 2
    %s18 = sadd.s32 %s11, 1
    %s19 = ssub.s32 %s11, %s18
    %p20 = scmp.eq.s32.totalorder %s19, 0
    %s22 = sadd.s32 %s21, 1
    %s23 = scalar_select %p20, %s21, %s22
    %p26 = pneg %p20
    %p27 = scmp.eq.s32.totalorder %s11, 1
    %p28 = por %p26, %p27
    %p29 = scmp.ne.s32.totalorder %s21, %s24
    %p30 = scmp.eq.s32.totalorder %s11, 0
    %p31 = por %p29, %p30
    %p32 = scmp.ne.s32.totalorder %s21, %s24
    %p33 = scmp.eq.s32.totalorder %s16, 1
    %p34 = por %p32, %p33
    %p35 = scmp.ne.s32.totalorder %s24, %s25
    %p36 = scmp.eq.s32.totalorder %s16, 0
    %p37 = por %p35, %p36
    %p38 = scmp.ne.s32.totalorder %s24, %s25
    %p39 = scmp.eq.s32.totalorder %s17, 1
    %p40 = por %p38, %p39
    %p42 = scmp.ne.s32.totalorder %s25, %s41
    %p43 = scmp.eq.s32.totalorder %s17, 0
    %p44 = por %p42, %p43
    %s46 = sadd.s32 %s45, 1
    %p49 = scmp.eq.s32.totalorder %s11, 1
    %p50 = scmp.ne.s32.totalorder %s45, %s47
    %p51 = scmp.eq.s32.totalorder %s11, 0
    %p52 = por %p50, %p51
    %p53 = scmp.ne.s32.totalorder %s45, %s47
    %p54 = scmp.eq.s32.totalorder %s16, 1
    %p55 = por %p53, %p54
    %p56 = scmp.ne.s32.totalorder %s47, %s48
    %p57 = scmp.eq.s32.totalorder %s16, 0
    %p58 = por %p56, %p57
    %p59 = scmp.ne.s32.totalorder %s47, %s48
    %p60 = scmp.eq.s32.totalorder %s17, 1
    %p61 = por %p59, %p60
    %p63 = scmp.ne.s32.totalorder %s48, %s62
    %p64 = scmp.eq.s32.totalorder %s17, 0
    %p65 = por %p63, %p64
    %s66 = ssub.s32 %s11, %s18
    %p67 = scmp.eq.s32.totalorder %s66, 0
    %s69 = sadd.s32 %s68, 1
    %s70 = scalar_select %p67, %s68, %s69
    %p73 = pneg %p67
    %p74 = scmp.eq.s32.totalorder %s11, 1
    %p75 = por %p73, %p74
    %p76 = scmp.ne.s32.totalorder %s68, %s71
    %p77 = scmp.eq.s32.totalorder %s11, 0
    %p78 = por %p76, %p77
    %p79 = scmp.ne.s32.totalorder %s68, %s71
    %p80 = scmp.eq.s32.totalorder %s16, 1
    %p81 = por %p79, %p80
    %p82 = scmp.ne.s32.totalorder %s71, %s72
    %p83 = scmp.eq.s32.totalorder %s16, 0
    %p84 = por %p82, %p83
    %p85 = scmp.ne.s32.totalorder %s71, %s72
    %p86 = scmp.eq.s32.totalorder %s17, 1
    %p87 = por %p85, %p86
    %p89 = scmp.ne.s32.totalorder %s72, %s88
    %p90 = scmp.eq.s32.totalorder %s17, 0
    %p91 = por %p89, %p90
    %s93 = sadd.s32 %s92, 1
    %p96 = scmp.eq.s32.totalorder %s11, 1
    %p97 = scmp.ne.s32.totalorder %s92, %s94
    %p98 = scmp.eq.s32.totalorder %s11, 0
    %p99 = por %p97, %p98
    %p100 = scmp.ne.s32.totalorder %s92, %s94
    %p101 = scmp.eq.s32.totalorder %s16, 1
    %p102 = por %p100, %p101
    %p103 = scmp.ne.s32.totalorder %s94, %s95
    %p104 = scmp.eq.s32.totalorder %s16, 0
    %p105 = por %p103, %p104
    %p106 = scmp.ne.s32.totalorder %s94, %s95
    %p107 = scmp.eq.s32.totalorder %s17, 1
    %p108 = por %p106, %p107
    %p110 = scmp.ne.s32.totalorder %s95, %s109
    %p111 = scmp.eq.s32.totalorder %s17, 0
    %p112 = por %p110, %p111
    %s114 = sadd.s32 %s113, 1
    %p117 = scmp.eq.s32.totalorder %s11, 1
    %p118 = scmp.ne.s32.totalorder %s113, %s115
    %p119 = scmp.eq.s32.totalorder %s11, 0
    %p120 = por %p118, %p119
    %p121 = scmp.ne.s32.totalorder %s113, %s115
    %p122 = scmp.eq.s32.totalorder %s16, 1
    %p123 = por %p121, %p122
    %p124 = scmp.ne.s32.totalorder %s115, %s116
    %p125 = scmp.eq.s32.totalorder %s16, 0
    %p126 = por %p124, %p125
    %p127 = scmp.ne.s32.totalorder %s115, %s116
    %p128 = scmp.eq.s32.totalorder %s17, 1
    %p129 = por %p127, %p128
    %p131 = scmp.ne.s32.totalorder %s116, %s130
    %p132 = scmp.eq.s32.totalorder %s17, 0
    %p133 = por %p131, %p132
    %p134 = scmp.le.s32.totalorder 1, %s11
    %p135 = scmp.lt.s32.totalorder %s11, 3
    %p136 = pnand %p134, %p135
    %p137 = pneg %p136
    // Predicated region
    $region9: #{a_call__.6} parent=5 // pred_check
      _
    $region10: #{a_call__.6} parent=5 // pred_check_branch
      %139 = sbr.rel (%p136) target = $region12
    $region11: #{a_call__.6} parent=5 // pred_region
      %s140 = ssub.s32 %s11, 1
      // Predicated region
      $region13: #{a_call__.6} parent=11 // pred_check
        %p141 = pneg %p58
      $region14: #{a_call__.6} parent=11 // pred_check_branch
        %143 = sbr.rel (%p141) target = $region16
      $region15: #{a_call__.6} parent=11 // pred_region
        _
      $region16: #{a_call__.6} parent=11 // pred_fallthru
        _
    $region12: #{a_call__.6} parent=5 // pred_fallthru
      _
    %p144 = scmp.lt.s32.totalorder %s11, 2
    // Predicated region
    $region17: #{a_call__.6} parent=5 // pred_check
      %p145 = pneg %p144
    $region18: #{a_call__.6} parent=5 // pred_check_branch
      %147 = sbr.rel (%p145) target = $region20
    $region19: #{a_call__.6} parent=5 // pred_region
      // Predicated region
      $region21: #{a_call__.6} parent=19 // pred_check
        %p148 = pneg %p31
      $region22: #{a_call__.6} parent=19 // pred_check_branch
        %150 = sbr.rel (%p148) target = $region24
      $region23: #{a_call__.6} parent=19 // pred_region
        %s151 = smul.u32 32, %s11
        %p152 = scmp.lt.s32.totalorder %s151, 63
        %s153 = scalar_select %p152, %s151, 63
        %s154 = smul.addr %s153, 8
        %s155 = scalar_lea.vmem %s0, %s154
        %s156 = smul.u32 32, %s11
      $region24: #{a_call__.6} parent=19 // pred_fallthru
        _
    $region20: #{a_call__.6} parent=5 // pred_fallthru
      _
    %p157 = scmp.le.s32.totalorder 1, %s11
    %p158 = scmp.lt.s32.totalorder %s11, 3
    %p159 = pnand %p157, %p158
    %p160 = pneg %p159
    // Predicated region
    $region25: #{a_call__.6} parent=5 // pred_check
      _
    $region26: #{a_call__.6} parent=5 // pred_check_branch
      %162 = sbr.rel (%p159) target = $region28
    $region27: #{a_call__.6} parent=5 // pred_region
      %s163 = ssub.s32 %s11, 1
      %s164 = smul.u32 32, %s16
      %p165 = scmp.lt.s32.totalorder %s164, 63
      %s166 = scalar_select %p165, %s164, 63
      %s167 = smul.addr %s166, 8
      %s168 = scalar_lea.vmem %s0, %s167
      %p169 = pneg %p37
      %p170 = pneg %p34
      %p171 = pneg %p58
      %p172 = pneg %p55
      %p173 = pneg %p84
      %p174 = pneg %p81
      %s175 = smul.u32 32, %s16
      %p176 = scmp.lt.s32.totalorder %s175, 63
      %s177 = scalar_select %p176, %s175, 63
      %s178 = smul.addr %s177, 8
      %s179 = scalar_lea.vmem %s2, %s178
      %p180 = pneg %p105
      %p181 = pneg %p102
      %p182 = pneg %p126
      %p183 = pneg %p123
      %s184 = smul.u32 32, %s16
      %p185 = scmp.lt.s32.totalorder %s184, 63
      %s186 = scalar_select %p185, %s184, 63
      %s187 = smul.addr %s186, 8
      %s188 = scalar_lea.vmem %s0, %s187
      %s189 = smul.u32 32, %s16
      %s190 = smul.u32 32, %s16
      %p191 = scmp.lt.s32.totalorder %s190, 63
      %s192 = scalar_select %p191, %s190, 63
      %s193 = smul.addr %s192, 8
      %s194 = scalar_lea.vmem %s2, %s193
      %s195 = smul.u32 32, %s16
      %p196 = scmp.eq.s32.totalorder %s16, 0
      // Predicated region
      $region29: #{a_call__.6} parent=27 // pred_check
        %p197 = pneg %p196
      $region30: #{a_call__.6} parent=27 // pred_check_branch
        %199 = sbr.rel (%p197) target = $region32
      $region31: #{a_call__.6} parent=27 // pred_region
        %200 = vst [vmem:[%s3] sm:$0x1] 0.0
        %201 = vst [vmem:[%s4] sm:$0x1] 0.0
      $region32: #{a_call__.6} parent=27 // pred_fallthru
        _
      %v202 = vld [vmem:[%s188] sm:$0xff]
      %v203 = vld [vmem:[%s188 + $0x8] sm:$0xff]
      %v204 = vld [vmem:[%s188 + $0x10] sm:$0xff]
      %v205 = vld [vmem:[%s188 + $0x18] sm:$0xff]
      %v206 = vld [vmem:[%s188 + $0x20] sm:$0xff]
      %v207 = vld [vmem:[%s188 + $0x28] sm:$0xff]
      %v208 = vld [vmem:[%s188 + $0x30] sm:$0xff]
      %v209 = vld [vmem:[%s188 + $0x38] sm:$0xff]
      %v210 = vld [vmem:[%s188 + $0x40] sm:$0xff]
      %v211 = vld [vmem:[%s188 + $0x48] sm:$0xff]
      %v212 = vld [vmem:[%s188 + $0x50] sm:$0xff]
      %v213 = vld [vmem:[%s188 + $0x58] sm:$0xff]
      %v214 = vld [vmem:[%s188 + $0x60] sm:$0xff]
      %v215 = vld [vmem:[%s188 + $0x68] sm:$0xff]
      %v216 = vld [vmem:[%s188 + $0x70] sm:$0xff]
      %v217 = vld [vmem:[%s188 + $0x78] sm:$0xff]
      %v218 = vld [vmem:[%s188 + $0x80] sm:$0xff]
      %v219 = vld [vmem:[%s188 + $0x88] sm:$0xff]
      %v220 = vld [vmem:[%s188 + $0x90] sm:$0xff]
      %v221 = vld [vmem:[%s188 + $0x98] sm:$0xff]
      %v222 = vld [vmem:[%s188 + $0xa0] sm:$0xff]
      %v223 = vld [vmem:[%s188 + $0xa8] sm:$0xff]
      %v224 = vld [vmem:[%s188 + $0xb0] sm:$0xff]
      %v225 = vld [vmem:[%s188 + $0xb8] sm:$0xff]
      %v226 = vld [vmem:[%s188 + $0xc0] sm:$0xff]
      %v227 = vld [vmem:[%s188 + $0xc8] sm:$0xff]
      %v228 = vld [vmem:[%s188 + $0xd0] sm:$0xff]
      %v229 = vld [vmem:[%s188 + $0xd8] sm:$0xff]
      %v230 = vld [vmem:[%s188 + $0xe0] sm:$0xff]
      %v231 = vld [vmem:[%s188 + $0xe8] sm:$0xff]
      %v232 = vld [vmem:[%s188 + $0xf0] sm:$0xff]
      %v233 = vld [vmem:[%s188 + $0xf8] sm:$0xff]
      %v234 = vld [vmem:[%s1] sm:$0xff]
      %v235 = vld [vmem:[%s1 + $0x8] sm:$0xff]
      %v236 = vld [vmem:[%s1 + $0x10] sm:$0xff]
      %v237 = vld [vmem:[%s1 + $0x18] sm:$0xff]
      %v238 = vld [vmem:[%s1 + $0x20] sm:$0xff]
      %v239 = vld [vmem:[%s1 + $0x28] sm:$0xff]
      %v240 = vld [vmem:[%s1 + $0x30] sm:$0xff]
      %v241 = vld [vmem:[%s1 + $0x38] sm:$0xff]
      %v242 = vld [vmem:[%s1 + $0x40] sm:$0xff]
      %vm243 = vcmask 588800
      %v245 = vsel %vm243, %v202, 0
      %v248 = vsel %vm243, %v203, 0
      %v251 = vsel %vm243, %v204, 0
      %v254 = vsel %vm243, %v205, 0
      %v257 = vsel %vm243, %v206, 0
      %v260 = vsel %vm243, %v207, 0
      %v263 = vsel %vm243, %v208, 0
      %v266 = vsel %vm243, %v209, 0
      %v269 = vsel %vm243, %v210, 0
      %v272 = vsel %vm243, %v211, 0
      %v275 = vsel %vm243, %v212, 0
      %v278 = vsel %vm243, %v213, 0
      %v281 = vsel %vm243, %v214, 0
      %v284 = vsel %vm243, %v215, 0
      %v287 = vsel %vm243, %v216, 0
      %v290 = vsel %vm243, %v217, 0
      %v293 = vsel %vm243, %v218, 0
      %v296 = vsel %vm243, %v219, 0
      %v299 = vsel %vm243, %v220, 0
      %v302 = vsel %vm243, %v221, 0
      %v305 = vsel %vm243, %v222, 0
      %v308 = vsel %vm243, %v223, 0
      %v311 = vsel %vm243, %v224, 0
      %v314 = vsel %vm243, %v225, 0
      %v317 = vsel %vm243, %v226, 0
      %v320 = vsel %vm243, %v227, 0
      %v323 = vsel %vm243, %v228, 0
      %v326 = vsel %vm243, %v229, 0
      %v329 = vsel %vm243, %v230, 0
      %v332 = vsel %vm243, %v231, 0
      %v335 = vsel %vm243, %v232, 0
      %v338 = vsel %vm243, %v233, 0
      %340 = vmatprep.subr.mxu0 0.0
      %341 = vmatpush1.msra.mxu0 0.0
      %342 = vmatprep.subr.mxu0 0.0
      %343 = vmatpush1.msra.mxu0 0.0
      %344 = vmatprep.subr.mxu0 0.0
      %345 = vmatpush1.msra.mxu0 0.0
      %346 = vmatprep.subr.mxu0 0.0
      %347 = vmatpush1.msra.mxu0 0.0
      %348 = vmatprep.subr.mxu0 0.0
      %349 = vmatpush1.msra.mxu0 0.0
      %350 = vmatprep.subr.mxu0 0.0
      %351 = vmatpush1.msra.mxu0 0.0
      %352 = vmatprep.subr.mxu0 0.0
      %353 = vmatpush1.msra.mxu0 0.0
      %354 = vmatprep.subr.mxu0 0.0
      %355 = vmatpush1.msra.mxu0 %v242
      %356 = vmatprep.subr.mxu0 0.0
      %357 = vmatpush1.msra.mxu0 %v241
      %358 = vmatprep.subr.mxu0 0.0
      %359 = vmatpush1.msra.mxu0 %v240
      %360 = vmatprep.subr.mxu0 0.0
      %361 = vmatpush1.msra.mxu0 %v239
      %362 = vmatprep.subr.mxu0 0.0
      %363 = vmatpush1.msra.mxu0 %v238
      %364 = vmatprep.subr.mxu0 0.0
      %365 = vmatpush1.msra.mxu0 %v237
      %366 = vmatprep.subr.mxu0 0.0
      %367 = vmatpush1.msra.mxu0 %v236
      %368 = vmatprep.subr.mxu0 0.0
      %369 = vmatpush1.msra.mxu0 %v235
      %370 = vmatprep.subr.mxu0 0.0
      %371 = vmatpush1.msra.mxu0 %v234
      %372 = vmatprep.subr.mxu0 0.0
      %373 = vmatpush2.msra.mxu0 0.0
      %374 = vmatprep.subr.mxu0 0.0
      %375 = vmatpush2.msra.mxu0 0.0
      %376 = vmatprep.subr.mxu0 0.0
      %377 = vmatpush2.msra.mxu0 0.0
      %378 = vmatprep.subr.mxu0 0.0
      %379 = vmatpush2.msra.mxu0 0.0
      %380 = vmatprep.subr.mxu0 0.0
      %381 = vmatpush2.msra.mxu0 0.0
      %382 = vmatprep.subr.mxu0 0.0
      %383 = vmatpush2.msra.mxu0 0.0
      %384 = vmatprep.subr.mxu0 0.0
      %385 = vmatpush2.msra.mxu0 0.0
      %386 = vmatprep.subr.mxu0 0.0
      %387 = vmatpush2.msra.mxu0 0.0
      %388 = vmatprep.subr.mxu0 0.0
      %389 = vmatpush2.msra.mxu0 0.0
      %390 = vmatprep.subr.mxu0 0.0
      %391 = vmatpush2.msra.mxu0 0.0
      %392 = vmatprep.subr.mxu0 0.0
      %393 = vmatpush2.msra.mxu0 0.0
      %394 = vmatprep.subr.mxu0 0.0
      %395 = vmatpush2.msra.mxu0 0.0
      %396 = vmatprep.subr.mxu0 0.0
      %397 = vmatpush2.msra.mxu0 0.0
      %398 = vmatprep.subr.mxu0 0.0
      %399 = vmatpush2.msra.mxu0 0.0
      %400 = vmatprep.subr.mxu0 0.0
      %401 = vmatpush2.msra.mxu0 0.0
      %402 = vmatprep.subr.mxu0 0.0
      %403 = vmatpush2.msra.mxu0 0.0
      %404 = vmatprep.mubr.f32.mxu0 0.0
      %405 = vmatmul.mubr.f32.gmra.mxu0 %v245
      %v406 = vpop.f32.mrf.mxu0
      %v407 = vadd.f32 0.0, %v406
      %v408 = vpop.f32.mrf.mxu0
      %409 = vmatprep.mubr.f32.mxu0 0.0
      %410 = vmatmul.mubr.f32.gmra.mxu0 %v248
      %v411 = vpop.f32.mrf.mxu0
      %v412 = vadd.f32 0.0, %v411
      %v413 = vpop.f32.mrf.mxu0
      %414 = vmatprep.mubr.f32.mxu0 0.0
      %415 = vmatmul.mubr.f32.gmra.mxu0 %v251
      %v416 = vpop.f32.mrf.mxu0
      %v417 = vadd.f32 0.0, %v416
      %v418 = vpop.f32.mrf.mxu0
      %419 = vmatprep.mubr.f32.mxu0 0.0
      %420 = vmatmul.mubr.f32.gmra.mxu0 %v254
      %v421 = vpop.f32.mrf.mxu0
      %v422 = vadd.f32 0.0, %v421
      %v423 = vpop.f32.mrf.mxu0
      %424 = vmatprep.mubr.f32.mxu0 0.0
      %425 = vmatmul.mubr.f32.gmra.mxu0 %v257
      %v426 = vpop.f32.mrf.mxu0
      %v427 = vadd.f32 0.0, %v426
      %v428 = vpop.f32.mrf.mxu0
      %429 = vmatprep.mubr.f32.mxu0 0.0
      %430 = vmatmul.mubr.f32.gmra.mxu0 %v260
      %v431 = vpop.f32.mrf.mxu0
      %v432 = vadd.f32 0.0, %v431
      %v433 = vpop.f32.mrf.mxu0
      %434 = vmatprep.mubr.f32.mxu0 0.0
      %435 = vmatmul.mubr.f32.gmra.mxu0 %v263
      %v436 = vpop.f32.mrf.mxu0
      %v437 = vadd.f32 0.0, %v436
      %v438 = vpop.f32.mrf.mxu0
      %439 = vmatprep.mubr.f32.mxu0 0.0
      %440 = vmatmul.mubr.f32.gmra.mxu0 %v266
      %v441 = vpop.f32.mrf.mxu0
      %v442 = vadd.f32 0.0, %v441
      %v443 = vpop.f32.mrf.mxu0
      %444 = vmatprep.mubr.f32.mxu0 0.0
      %445 = vmatmul.mubr.f32.gmra.mxu0 %v269
      %v446 = vpop.f32.mrf.mxu0
      %v447 = vadd.f32 0.0, %v446
      %v448 = vpop.f32.mrf.mxu0
      %449 = vmatprep.mubr.f32.mxu0 0.0
      %450 = vmatmul.mubr.f32.gmra.mxu0 %v272
      %v451 = vpop.f32.mrf.mxu0
      %v452 = vadd.f32 0.0, %v451
      %v453 = vpop.f32.mrf.mxu0
      %454 = vmatprep.mubr.f32.mxu0 0.0
      %455 = vmatmul.mubr.f32.gmra.mxu0 %v275
      %v456 = vpop.f32.mrf.mxu0
      %v457 = vadd.f32 0.0, %v456
      %v458 = vpop.f32.mrf.mxu0
      %459 = vmatprep.mubr.f32.mxu0 0.0
      %460 = vmatmul.mubr.f32.gmra.mxu0 %v278
      %v461 = vpop.f32.mrf.mxu0
      %v462 = vadd.f32 0.0, %v461
      %v463 = vpop.f32.mrf.mxu0
      %464 = vmatprep.mubr.f32.mxu0 0.0
      %465 = vmatmul.mubr.f32.gmra.mxu0 %v281
      %v466 = vpop.f32.mrf.mxu0
      %v467 = vadd.f32 0.0, %v466
      %v468 = vpop.f32.mrf.mxu0
      %469 = vmatprep.mubr.f32.mxu0 0.0
      %470 = vmatmul.mubr.f32.gmra.mxu0 %v284
      %v471 = vpop.f32.mrf.mxu0
      %v472 = vadd.f32 0.0, %v471
      %v473 = vpop.f32.mrf.mxu0
      %474 = vmatprep.mubr.f32.mxu0 0.0
      %475 = vmatmul.mubr.f32.gmra.mxu0 %v287
      %v476 = vpop.f32.mrf.mxu0
      %v477 = vadd.f32 0.0, %v476
      %v478 = vpop.f32.mrf.mxu0
      %479 = vmatprep.mubr.f32.mxu0 0.0
      %480 = vmatmul.mubr.f32.gmra.mxu0 %v290
      %v481 = vpop.f32.mrf.mxu0
      %v482 = vadd.f32 0.0, %v481
      %v483 = vpop.f32.mrf.mxu0
      %484 = vmatprep.mubr.f32.mxu0 0.0
      %485 = vmatmul.mubr.f32.gmra.mxu0 %v293
      %v486 = vpop.f32.mrf.mxu0
      %v487 = vadd.f32 0.0, %v486
      %v488 = vpop.f32.mrf.mxu0
      %489 = vmatprep.mubr.f32.mxu0 0.0
      %490 = vmatmul.mubr.f32.gmra.mxu0 %v296
      %v491 = vpop.f32.mrf.mxu0
      %v492 = vadd.f32 0.0, %v491
      %v493 = vpop.f32.mrf.mxu0
      %494 = vmatprep.mubr.f32.mxu0 0.0
      %495 = vmatmul.mubr.f32.gmra.mxu0 %v299
      %v496 = vpop.f32.mrf.mxu0
      %v497 = vadd.f32 0.0, %v496
      %v498 = vpop.f32.mrf.mxu0
      %499 = vmatprep.mubr.f32.mxu0 0.0
      %500 = vmatmul.mubr.f32.gmra.mxu0 %v302
      %v501 = vpop.f32.mrf.mxu0
      %v502 = vadd.f32 0.0, %v501
      %v503 = vpop.f32.mrf.mxu0
      %504 = vmatprep.mubr.f32.mxu0 0.0
      %505 = vmatmul.mubr.f32.gmra.mxu0 %v305
      %v506 = vpop.f32.mrf.mxu0
      %v507 = vadd.f32 0.0, %v506
      %v508 = vpop.f32.mrf.mxu0
      %509 = vmatprep.mubr.f32.mxu0 0.0
      %510 = vmatmul.mubr.f32.gmra.mxu0 %v308
      %v511 = vpop.f32.mrf.mxu0
      %v512 = vadd.f32 0.0, %v511
      %v513 = vpop.f32.mrf.mxu0
      %514 = vmatprep.mubr.f32.mxu0 0.0
      %515 = vmatmul.mubr.f32.gmra.mxu0 %v311
      %v516 = vpop.f32.mrf.mxu0
      %v517 = vadd.f32 0.0, %v516
      %v518 = vpop.f32.mrf.mxu0
      %519 = vmatprep.mubr.f32.mxu0 0.0
      %520 = vmatmul.mubr.f32.gmra.mxu0 %v314
      %v521 = vpop.f32.mrf.mxu0
      %v522 = vadd.f32 0.0, %v521
      %v523 = vpop.f32.mrf.mxu0
      %524 = vmatprep.mubr.f32.mxu0 0.0
      %525 = vmatmul.mubr.f32.gmra.mxu0 %v317
      %v526 = vpop.f32.mrf.mxu0
      %v527 = vadd.f32 0.0, %v526
      %v528 = vpop.f32.mrf.mxu0
      %529 = vmatprep.mubr.f32.mxu0 0.0
      %530 = vmatmul.mubr.f32.gmra.mxu0 %v320
      %v531 = vpop.f32.mrf.mxu0
      %v532 = vadd.f32 0.0, %v531
      %v533 = vpop.f32.mrf.mxu0
      %534 = vmatprep.mubr.f32.mxu0 0.0
      %535 = vmatmul.mubr.f32.gmra.mxu0 %v323
      %v536 = vpop.f32.mrf.mxu0
      %v537 = vadd.f32 0.0, %v536
      %v538 = vpop.f32.mrf.mxu0
      %539 = vmatprep.mubr.f32.mxu0 0.0
      %540 = vmatmul.mubr.f32.gmra.mxu0 %v326
      %v541 = vpop.f32.mrf.mxu0
      %v542 = vadd.f32 0.0, %v541
      %v543 = vpop.f32.mrf.mxu0
      %544 = vmatprep.mubr.f32.mxu0 0.0
      %545 = vmatmul.mubr.f32.gmra.mxu0 %v329
      %v546 = vpop.f32.mrf.mxu0
      %v547 = vadd.f32 0.0, %v546
      %v548 = vpop.f32.mrf.mxu0
      %549 = vmatprep.mubr.f32.mxu0 0.0
      %550 = vmatmul.mubr.f32.gmra.mxu0 %v332
      %v551 = vpop.f32.mrf.mxu0
      %v552 = vadd.f32 0.0, %v551
      %v553 = vpop.f32.mrf.mxu0
      %554 = vmatprep.mubr.f32.mxu0 0.0
      %555 = vmatmul.mubr.f32.gmra.mxu0 %v335
      %v556 = vpop.f32.mrf.mxu0
      %v557 = vadd.f32 0.0, %v556
      %v558 = vpop.f32.mrf.mxu0
      %559 = vmatprep.mubr.f32.mxu0 0.0
      %560 = vmatmul.mubr.f32.gmra.mxu0 %v338
      %v561 = vpop.f32.mrf.mxu0
      %v562 = vadd.f32 0.0, %v561
      %v563 = vpop.f32.mrf.mxu0
      %564 = vdwg.mxu0
      %565 = vst [vmem:[%s194] sm:$0xff] %v407
      %566 = vst [vmem:[%s194 + $0x8] sm:$0xff] %v412
      %567 = vst [vmem:[%s194 + $0x10] sm:$0xff] %v417
      %568 = vst [vmem:[%s194 + $0x18] sm:$0xff] %v422
      %569 = vst [vmem:[%s194 + $0x20] sm:$0xff] %v427
      %570 = vst [vmem:[%s194 + $0x28] sm:$0xff] %v432
      %571 = vst [vmem:[%s194 + $0x30] sm:$0xff] %v437
      %572 = vst [vmem:[%s194 + $0x38] sm:$0xff] %v442
      %573 = vst [vmem:[%s194 + $0x40] sm:$0xff] %v447
      %574 = vst [vmem:[%s194 + $0x48] sm:$0xff] %v452
      %575 = vst [vmem:[%s194 + $0x50] sm:$0xff] %v457
      %576 = vst [vmem:[%s194 + $0x58] sm:$0xff] %v462
      %577 = vst [vmem:[%s194 + $0x60] sm:$0xff] %v467
      %578 = vst [vmem:[%s194 + $0x68] sm:$0xff] %v472
      %579 = vst [vmem:[%s194 + $0x70] sm:$0xff] %v477
      %580 = vst [vmem:[%s194 + $0x78] sm:$0xff] %v482
      %581 = vst [vmem:[%s194 + $0x80] sm:$0xff] %v487
      %582 = vst [vmem:[%s194 + $0x88] sm:$0xff] %v492
      %583 = vst [vmem:[%s194 + $0x90] sm:$0xff] %v497
      %584 = vst [vmem:[%s194 + $0x98] sm:$0xff] %v502
      %585 = vst [vmem:[%s194 + $0xa0] sm:$0xff] %v507
      %586 = vst [vmem:[%s194 + $0xa8] sm:$0xff] %v512
      %587 = vst [vmem:[%s194 + $0xb0] sm:$0xff] %v517
      %588 = vst [vmem:[%s194 + $0xb8] sm:$0xff] %v522
      %589 = vst [vmem:[%s194 + $0xc0] sm:$0xff] %v527
      %590 = vst [vmem:[%s194 + $0xc8] sm:$0xff] %v532
      %591 = vst [vmem:[%s194 + $0xd0] sm:$0xff] %v537
      %592 = vst [vmem:[%s194 + $0xd8] sm:$0xff] %v542
      %593 = vst [vmem:[%s194 + $0xe0] sm:$0xff] %v547
      %594 = vst [vmem:[%s194 + $0xe8] sm:$0xff] %v552
      %595 = vst [vmem:[%s194 + $0xf0] sm:$0xff] %v557
      %596 = vst [vmem:[%s194 + $0xf8] sm:$0xff] %v562
      %v597 = vld [vmem:[%s3] sm:$0x1]
      %v598 = vadd.f32 %v407, %v412
      %v599 = vadd.f32 %v598, %v417
      %v600 = vadd.f32 %v599, %v422
      %v601 = vadd.f32 %v600, %v427
      %v602 = vadd.f32 %v601, %v432
      %v603 = vadd.f32 %v602, %v437
      %v604 = vadd.f32 %v603, %v442
      %v605 = vadd.f32 %v604, %v447
      %v606 = vadd.f32 %v605, %v452
      %v607 = vadd.f32 %v606, %v457
      %v608 = vadd.f32 %v607, %v462
      %v609 = vadd.f32 %v608, %v467
      %v610 = vadd.f32 %v609, %v472
      %v611 = vadd.f32 %v610, %v477
      %v612 = vadd.f32 %v611, %v482
      %v613 = vadd.f32 %v612, %v487
      %v614 = vadd.f32 %v613, %v492
      %v615 = vadd.f32 %v614, %v497
      %v616 = vadd.f32 %v615, %v502
      %v617 = vadd.f32 %v616, %v507
      %v618 = vadd.f32 %v617, %v512
      %v619 = vadd.f32 %v618, %v517
      %v620 = vadd.f32 %v619, %v522
      %v621 = vadd.f32 %v620, %v527
      %v622 = vadd.f32 %v621, %v532
      %v623 = vadd.f32 %v622, %v537
      %v624 = vadd.f32 %v623, %v542
      %v625 = vadd.f32 %v624, %v547
      %v626 = vadd.f32 %v625, %v552
      %v627 = vadd.f32 %v626, %v557
      %v628 = vadd.f32 %v627, %v562
      %v629 = vrot.slane %v628, 4
      %v630 = vadd.f32 %v628, %v629
      %v631 = vrot.slane %v630, 2
      %v632 = vadd.f32 %v630, %v631
      %v633 = vrot.slane %v632, 1
      %v634 = vadd.f32 %v632, %v633
      %v635 = vadd.f32 %v597, %v634
      %636 = vst [vmem:[%s3] sm:$0x1] %v635
      %v637 = vld [vmem:[%s4] sm:$0x1]
      %v638 = vmul.f32 %v407, %v407
      %v639 = vmul.f32 %v412, %v412
      %v640 = vmul.f32 %v417, %v417
      %v641 = vmul.f32 %v422, %v422
      %v642 = vmul.f32 %v427, %v427
      %v643 = vmul.f32 %v432, %v432
      %v644 = vmul.f32 %v437, %v437
      %v645 = vmul.f32 %v442, %v442
      %v646 = vmul.f32 %v447, %v447
      %v647 = vmul.f32 %v452, %v452
      %v648 = vmul.f32 %v457, %v457
      %v649 = vmul.f32 %v462, %v462
      %v650 = vmul.f32 %v467, %v467
      %v651 = vmul.f32 %v472, %v472
      %v652 = vmul.f32 %v477, %v477
      %v653 = vmul.f32 %v482, %v482
      %v654 = vmul.f32 %v487, %v487
      %v655 = vmul.f32 %v492, %v492
      %v656 = vmul.f32 %v497, %v497
      %v657 = vmul.f32 %v502, %v502
      %v658 = vmul.f32 %v507, %v507
      %v659 = vmul.f32 %v512, %v512
      %v660 = vmul.f32 %v517, %v517
      %v661 = vmul.f32 %v522, %v522
      %v662 = vmul.f32 %v527, %v527
      %v663 = vmul.f32 %v532, %v532
      %v664 = vmul.f32 %v537, %v537
      %v665 = vmul.f32 %v542, %v542
      %v666 = vmul.f32 %v547, %v547
      %v667 = vmul.f32 %v552, %v552
      %v668 = vmul.f32 %v557, %v557
      %v669 = vmul.f32 %v562, %v562
      %v670 = vadd.f32 %v638, %v639
      %v671 = vadd.f32 %v670, %v640
      %v672 = vadd.f32 %v671, %v641
      %v673 = vadd.f32 %v672, %v642
      %v674 = vadd.f32 %v673, %v643
      %v675 = vadd.f32 %v674, %v644
      %v676 = vadd.f32 %v675, %v645
      %v677 = vadd.f32 %v676, %v646
      %v678 = vadd.f32 %v677, %v647
      %v679 = vadd.f32 %v678, %v648
      %v680 = vadd.f32 %v679, %v649
      %v681 = vadd.f32 %v680, %v650
      %v682 = vadd.f32 %v681, %v651
      %v683 = vadd.f32 %v682, %v652
      %v684 = vadd.f32 %v683, %v653
      %v685 = vadd.f32 %v684, %v654
      %v686 = vadd.f32 %v685, %v655
      %v687 = vadd.f32 %v686, %v656
      %v688 = vadd.f32 %v687, %v657
      %v689 = vadd.f32 %v688, %v658
      %v690 = vadd.f32 %v689, %v659
      %v691 = vadd.f32 %v690, %v660
      %v692 = vadd.f32 %v691, %v661
      %v693 = vadd.f32 %v692, %v662
      %v694 = vadd.f32 %v693, %v663
      %v695 = vadd.f32 %v694, %v664
      %v696 = vadd.f32 %v695, %v665
      %v697 = vadd.f32 %v696, %v666
      %v698 = vadd.f32 %v697, %v667
      %v699 = vadd.f32 %v698, %v668
      %v700 = vadd.f32 %v699, %v669
      %v701 = vrot.slane %v700, 4
      %v702 = vadd.f32 %v700, %v701
      %v703 = vrot.slane %v702, 2
      %v704 = vadd.f32 %v702, %v703
      %v705 = vrot.slane %v704, 1
      %v706 = vadd.f32 %v704, %v705
      %v707 = vadd.f32 %v637, %v706
      %708 = vst [vmem:[%s4] sm:$0x1] %v707
      %s709 = smul.u32 32, %s16
      %p710 = scmp.lt.s32.totalorder %s709, 63
      %s711 = scalar_select %p710, %s709, 63
      %s712 = smul.addr %s711, 8
      %s713 = scalar_lea.vmem %s2, %s712
      // Predicated region
      $region33: #{a_call__.6} parent=27 // pred_check
        %p714 = pneg %p81
      $region34: #{a_call__.6} parent=27 // pred_check_branch
        %716 = sbr.rel (%p714) target = $region36
      $region35: #{a_call__.6} parent=27 // pred_region
        %s717 = smul.u32 32, %s16
      $region36: #{a_call__.6} parent=27 // pred_fallthru
        _
      // Predicated region
      $region37: #{a_call__.6} parent=27 // pred_check
        %p718 = pneg %p102
      $region38: #{a_call__.6} parent=27 // pred_check_branch
        %720 = sbr.rel (%p718) target = $region40
      $region39: #{a_call__.6} parent=27 // pred_region
        _
      $region40: #{a_call__.6} parent=27 // pred_fallthru
        _
      // Predicated region
      $region41: #{a_call__.6} parent=27 // pred_check
        %p721 = pneg %p123
      $region42: #{a_call__.6} parent=27 // pred_check_branch
        %723 = sbr.rel (%p721) target = $region44
      $region43: #{a_call__.6} parent=27 // pred_region
        _
      $region44: #{a_call__.6} parent=27 // pred_fallthru
        _
      // Predicated region
      $region45: #{a_call__.6} parent=27 // pred_check
        %p724 = pneg %p102
      $region46: #{a_call__.6} parent=27 // pred_check_branch
        %726 = sbr.rel (%p724) target = $region48
      $region47: #{a_call__.6} parent=27 // pred_region
        _
      $region48: #{a_call__.6} parent=27 // pred_fallthru
        _
      // Predicated region
      $region49: #{a_call__.6} parent=27 // pred_check
        %p727 = pneg %p123
      $region50: #{a_call__.6} parent=27 // pred_check_branch
        %729 = sbr.rel (%p727) target = $region52
      $region51: #{a_call__.6} parent=27 // pred_region
        _
      $region52: #{a_call__.6} parent=27 // pred_fallthru
        _
    $region28: #{a_call__.6} parent=5 // pred_fallthru
      _
    %p730 = scmp.le.s32.totalorder 2, %s11
    // Predicated region
    $region53: #{a_call__.6} parent=5 // pred_check
      %p731 = pneg %p730
    $region54: #{a_call__.6} parent=5 // pred_check_branch
      %733 = sbr.rel (%p731) target = $region56
    $region55: #{a_call__.6} parent=5 // pred_region
      %s734 = ssub.s32 %s11, 2
      // Predicated region
      $region57: #{a_call__.6} parent=55 // pred_check
        %p735 = pneg %p87
      $region58: #{a_call__.6} parent=55 // pred_check_branch
        %737 = sbr.rel (%p735) target = $region60
      $region59: #{a_call__.6} parent=55 // pred_region
        %s738 = smul.u32 32, %s17
        %p739 = scmp.lt.s32.totalorder %s738, 63
        %s740 = scalar_select %p739, %s738, 63
        %s741 = smul.addr %s740, 8
        %s742 = scalar_lea.vmem %s2, %s741
      $region60: #{a_call__.6} parent=55 // pred_fallthru
        _
    $region56: #{a_call__.6} parent=5 // pred_fallthru
      _
  $region6: #{a_call__.6} parent=0 // loop_footer
    %s15 = sadd.s32 1, %s11
  $region7: #{a_call__.6} parent=0 // loop_footer_branch
    %10 = sbr.rel target = $region3
  $region8: #{a_call__.6} parent=0 // loop_exit
    _

// kernel: a_call__.7
$region0: #{a_call__.7}
  #allocation0 [shape = 'u32[]', space=smem, size = 0x4, offset = 0x4, fixed_abs, tag = 'smem constant byte address 0x4 - core index']
  #allocation1 [shape = 'u32[144,128]{1,0:T(1,128)}', space=vmem, size = 0x12000, scoped, tag = 'internal scratch']
  %s0 = inlined_call_operand.vmem [shape: f32[512,128], index: 0, kind: input, shape index: {}]
  %s1 = inlined_call_operand.vmem [shape: f32[1,128], index: 1, kind: input, shape index: {}]
  %s2 = inlined_call_operand.vmem [shape: f32[1,128], index: 2, kind: input, shape index: {}]
  %s3 = inlined_call_operand.vmem [shape: f32[512,128], index: 3, kind: input, shape index: {}]
  %s4 = inlined_call_operand.vmem [shape: f32[512,128], index: 4, kind: output, shape index: {}]
  %s5 = sld [smem:[#allocation0]]
  $region49: #{a_call__.7} parent=0
    _
  %s7 = ssub.s32 1, %s5
  %s8 = scalar_select 0, %s7, %s5
  loop: start=0, step=1, limit=4
  $region2: #{a_call__.7} parent=0 // loop_pre_header
    _
  $region3: #{a_call__.7} parent=0 // loop_header
    %s10 = sphi 0, %s14
    %p11 = scmp.ge.s32.totalorder %s10, 4
    %s20 = sphi 0, %s22
    %s23 = sphi 0, %s20
    %s24 = sphi 0, %s23
    %s40 = sphi 0, %s24
    %s44 = sphi 0, %s44
    %s46 = sphi 0, %s44
    %s47 = sphi 0, %s46
    %s61 = sphi 0, %s47
    %s65 = sphi 0, %s65
    %s67 = sphi 0, %s65
    %s68 = sphi 0, %s67
    %s82 = sphi 0, %s68
    %s88 = sphi 0, %s90
    %s91 = sphi 0, %s88
    %s92 = sphi 0, %s91
    %s108 = sphi 0, %s92
    %s114 = sphi 0, %s116
    %s117 = sphi 0, %s114
    %s118 = sphi 0, %s117
    %s134 = sphi 0, %s118
  $region4: #{a_call__.7} parent=0 // loop_header_branch
    %13 = sbr.rel (%p11) target = $region8
  $region5: #{a_call__.7} parent=0 // loop_body
    %s15 = ssub.s32 %s10, 1
    %s16 = ssub.s32 %s10, 2
    %s17 = sadd.s32 %s10, 1
    %s18 = ssub.s32 %s10, %s17
    %p19 = scmp.eq.s32.totalorder %s18, 0
    %s21 = sadd.s32 %s20, 1
    %s22 = scalar_select %p19, %s20, %s21
    %p25 = pneg %p19
    %p26 = scmp.eq.s32.totalorder %s10, 1
    %p27 = por %p25, %p26
    %p28 = scmp.ne.s32.totalorder %s20, %s23
    %p29 = scmp.eq.s32.totalorder %s10, 0
    %p30 = por %p28, %p29
    %p31 = scmp.ne.s32.totalorder %s20, %s23
    %p32 = scmp.eq.s32.totalorder %s15, 1
    %p33 = por %p31, %p32
    %p34 = scmp.ne.s32.totalorder %s23, %s24
    %p35 = scmp.eq.s32.totalorder %s15, 0
    %p36 = por %p34, %p35
    %p37 = scmp.ne.s32.totalorder %s23, %s24
    %p38 = scmp.eq.s32.totalorder %s16, 1
    %p39 = por %p37, %p38
    %p41 = scmp.ne.s32.totalorder %s24, %s40
    %p42 = scmp.eq.s32.totalorder %s16, 0
    %p43 = por %p41, %p42
    %s45 = sadd.s32 %s44, 1
    %p48 = scmp.eq.s32.totalorder %s10, 1
    %p49 = scmp.ne.s32.totalorder %s44, %s46
    %p50 = scmp.eq.s32.totalorder %s10, 0
    %p51 = por %p49, %p50
    %p52 = scmp.ne.s32.totalorder %s44, %s46
    %p53 = scmp.eq.s32.totalorder %s15, 1
    %p54 = por %p52, %p53
    %p55 = scmp.ne.s32.totalorder %s46, %s47
    %p56 = scmp.eq.s32.totalorder %s15, 0
    %p57 = por %p55, %p56
    %p58 = scmp.ne.s32.totalorder %s46, %s47
    %p59 = scmp.eq.s32.totalorder %s16, 1
    %p60 = por %p58, %p59
    %p62 = scmp.ne.s32.totalorder %s47, %s61
    %p63 = scmp.eq.s32.totalorder %s16, 0
    %p64 = por %p62, %p63
    %s66 = sadd.s32 %s65, 1
    %p69 = scmp.eq.s32.totalorder %s10, 1
    %p70 = scmp.ne.s32.totalorder %s65, %s67
    %p71 = scmp.eq.s32.totalorder %s10, 0
    %p72 = por %p70, %p71
    %p73 = scmp.ne.s32.totalorder %s65, %s67
    %p74 = scmp.eq.s32.totalorder %s15, 1
    %p75 = por %p73, %p74
    %p76 = scmp.ne.s32.totalorder %s67, %s68
    %p77 = scmp.eq.s32.totalorder %s15, 0
    %p78 = por %p76, %p77
    %p79 = scmp.ne.s32.totalorder %s67, %s68
    %p80 = scmp.eq.s32.totalorder %s16, 1
    %p81 = por %p79, %p80
    %p83 = scmp.ne.s32.totalorder %s68, %s82
    %p84 = scmp.eq.s32.totalorder %s16, 0
    %p85 = por %p83, %p84
    %s86 = ssub.s32 %s10, %s17
    %p87 = scmp.eq.s32.totalorder %s86, 0
    %s89 = sadd.s32 %s88, 1
    %s90 = scalar_select %p87, %s88, %s89
    %p93 = pneg %p87
    %p94 = scmp.eq.s32.totalorder %s10, 1
    %p95 = por %p93, %p94
    %p96 = scmp.ne.s32.totalorder %s88, %s91
    %p97 = scmp.eq.s32.totalorder %s10, 0
    %p98 = por %p96, %p97
    %p99 = scmp.ne.s32.totalorder %s88, %s91
    %p100 = scmp.eq.s32.totalorder %s15, 1
    %p101 = por %p99, %p100
    %p102 = scmp.ne.s32.totalorder %s91, %s92
    %p103 = scmp.eq.s32.totalorder %s15, 0
    %p104 = por %p102, %p103
    %p105 = scmp.ne.s32.totalorder %s91, %s92
    %p106 = scmp.eq.s32.totalorder %s16, 1
    %p107 = por %p105, %p106
    %p109 = scmp.ne.s32.totalorder %s92, %s108
    %p110 = scmp.eq.s32.totalorder %s16, 0
    %p111 = por %p109, %p110
    %s112 = ssub.s32 %s10, %s17
    %p113 = scmp.eq.s32.totalorder %s112, 0
    %s115 = sadd.s32 %s114, 1
    %s116 = scalar_select %p113, %s114, %s115
    %p119 = pneg %p113
    %p120 = scmp.eq.s32.totalorder %s10, 1
    %p121 = por %p119, %p120
    %p122 = scmp.ne.s32.totalorder %s114, %s117
    %p123 = scmp.eq.s32.totalorder %s10, 0
    %p124 = por %p122, %p123
    %p125 = scmp.ne.s32.totalorder %s114, %s117
    %p126 = scmp.eq.s32.totalorder %s15, 1
    %p127 = por %p125, %p126
    %p128 = scmp.ne.s32.totalorder %s117, %s118
    %p129 = scmp.eq.s32.totalorder %s15, 0
    %p130 = por %p128, %p129
    %p131 = scmp.ne.s32.totalorder %s117, %s118
    %p132 = scmp.eq.s32.totalorder %s16, 1
    %p133 = por %p131, %p132
    %p135 = scmp.ne.s32.totalorder %s118, %s134
    %p136 = scmp.eq.s32.totalorder %s16, 0
    %p137 = por %p135, %p136
    %p138 = scmp.le.s32.totalorder 1, %s10
    %p139 = scmp.lt.s32.totalorder %s10, 3
    %p140 = pnand %p138, %p139
    %p141 = pneg %p140
    // Predicated region
    $region9: #{a_call__.7} parent=5 // pred_check
      _
    $region10: #{a_call__.7} parent=5 // pred_check_branch
      %143 = sbr.rel (%p140) target = $region12
    $region11: #{a_call__.7} parent=5 // pred_region
      %s144 = ssub.s32 %s10, 1
      // Predicated region
      $region13: #{a_call__.7} parent=11 // pred_check
        %p145 = pneg %p57
      $region14: #{a_call__.7} parent=11 // pred_check_branch
        %147 = sbr.rel (%p145) target = $region16
      $region15: #{a_call__.7} parent=11 // pred_region
        _
      $region16: #{a_call__.7} parent=11 // pred_fallthru
        _
      // Predicated region
      $region17: #{a_call__.7} parent=11 // pred_check
        %p148 = pneg %p78
      $region18: #{a_call__.7} parent=11 // pred_check_branch
        %150 = sbr.rel (%p148) target = $region20
      $region19: #{a_call__.7} parent=11 // pred_region
        _
      $region20: #{a_call__.7} parent=11 // pred_fallthru
        _
    $region12: #{a_call__.7} parent=5 // pred_fallthru
      _
    %p151 = scmp.lt.s32.totalorder %s10, 2
    // Predicated region
    $region21: #{a_call__.7} parent=5 // pred_check
      %p152 = pneg %p151
    $region22: #{a_call__.7} parent=5 // pred_check_branch
      %154 = sbr.rel (%p152) target = $region24
    $region23: #{a_call__.7} parent=5 // pred_region
      // Predicated region
      $region25: #{a_call__.7} parent=23 // pred_check
        %p155 = pneg %p30
      $region26: #{a_call__.7} parent=23 // pred_check_branch
        %157 = sbr.rel (%p155) target = $region28
      $region27: #{a_call__.7} parent=23 // pred_region
        %s158 = smul.u32 32, %s10
        %p159 = scmp.lt.s32.totalorder %s158, 63
        %s160 = scalar_select %p159, %s158, 63
        %s161 = smul.addr %s160, 8
        %s162 = scalar_lea.vmem %s0, %s161
        %s163 = smul.u32 32, %s10
      $region28: #{a_call__.7} parent=23 // pred_fallthru
        _
      // Predicated region
      $region29: #{a_call__.7} parent=23 // pred_check
        %p164 = pneg %p98
      $region30: #{a_call__.7} parent=23 // pred_check_branch
        %166 = sbr.rel (%p164) target = $region32
      $region31: #{a_call__.7} parent=23 // pred_region
        %s167 = smul.u32 32, %s10
        %p168 = scmp.lt.s32.totalorder %s167, 63
        %s169 = scalar_select %p168, %s167, 63
        %s170 = smul.addr %s169, 8
        %s171 = scalar_lea.vmem %s3, %s170
        %s172 = smul.u32 32, %s10
      $region32: #{a_call__.7} parent=23 // pred_fallthru
        _
    $region24: #{a_call__.7} parent=5 // pred_fallthru
      _
    %p173 = scmp.le.s32.totalorder 1, %s10
    %p174 = scmp.lt.s32.totalorder %s10, 3
    %p175 = pnand %p173, %p174
    %p176 = pneg %p175
    // Predicated region
    $region33: #{a_call__.7} parent=5 // pred_check
      _
    $region34: #{a_call__.7} parent=5 // pred_check_branch
      %178 = sbr.rel (%p175) target = $region36
    $region35: #{a_call__.7} parent=5 // pred_region
      %s179 = ssub.s32 %s10, 1
      %s180 = smul.u32 32, %s15
      %p181 = scmp.lt.s32.totalorder %s180, 63
      %s182 = scalar_select %p181, %s180, 63
      %s183 = smul.addr %s182, 8
      %s184 = scalar_lea.vmem %s0, %s183
      %p185 = pneg %p36
      %p186 = pneg %p33
      %p187 = pneg %p57
      %p188 = pneg %p54
      %p189 = pneg %p78
      %p190 = pneg %p75
      %s191 = smul.u32 32, %s15
      %p192 = scmp.lt.s32.totalorder %s191, 63
      %s193 = scalar_select %p192, %s191, 63
      %s194 = smul.addr %s193, 8
      %s195 = scalar_lea.vmem %s3, %s194
      %p196 = pneg %p104
      %p197 = pneg %p101
      %p198 = pneg %p130
      %p199 = pneg %p127
      %s200 = smul.u32 32, %s15
      %p201 = scmp.lt.s32.totalorder %s200, 63
      %s202 = scalar_select %p201, %s200, 63
      %s203 = smul.addr %s202, 8
      %s204 = scalar_lea.vmem %s4, %s203
      %s205 = smul.u32 32, %s15
      %p206 = scmp.lt.s32.totalorder %s205, 63
      %s207 = scalar_select %p206, %s205, 63
      %s208 = smul.addr %s207, 8
      %s209 = scalar_lea.vmem %s0, %s208
      %s210 = smul.u32 32, %s15
      %s211 = smul.u32 32, %s15
      %p212 = scmp.lt.s32.totalorder %s211, 63
      %s213 = scalar_select %p212, %s211, 63
      %s214 = smul.addr %s213, 8
      %s215 = scalar_lea.vmem %s3, %s214
      %s216 = smul.u32 32, %s15
      %s217 = smul.u32 32, %s15
      %p218 = scmp.lt.s32.totalorder %s217, 63
      %s219 = scalar_select %p218, %s217, 63
      %s220 = smul.addr %s219, 8
      %s221 = scalar_lea.vmem %s4, %s220
      %s222 = smul.u32 32, %s15
      %v223 = vld [vmem:[%s209] sm:$0xff]
      %v224 = vld [vmem:[%s209 + $0x8] sm:$0xff]
      %v225 = vld [vmem:[%s209 + $0x10] sm:$0xff]
      %v226 = vld [vmem:[%s209 + $0x18] sm:$0xff]
      %v227 = vld [vmem:[%s209 + $0x20] sm:$0xff]
      %v228 = vld [vmem:[%s209 + $0x28] sm:$0xff]
      %v229 = vld [vmem:[%s209 + $0x30] sm:$0xff]
      %v230 = vld [vmem:[%s209 + $0x38] sm:$0xff]
      %v231 = vld [vmem:[%s209 + $0x40] sm:$0xff]
      %v232 = vld [vmem:[%s209 + $0x48] sm:$0xff]
      %v233 = vld [vmem:[%s209 + $0x50] sm:$0xff]
      %v234 = vld [vmem:[%s209 + $0x58] sm:$0xff]
      %v235 = vld [vmem:[%s209 + $0x60] sm:$0xff]
      %v236 = vld [vmem:[%s209 + $0x68] sm:$0xff]
      %v237 = vld [vmem:[%s209 + $0x70] sm:$0xff]
      %v238 = vld [vmem:[%s209 + $0x78] sm:$0xff]
      %v239 = vld [vmem:[%s209 + $0x80] sm:$0xff]
      %v240 = vld [vmem:[%s209 + $0x88] sm:$0xff]
      %v241 = vld [vmem:[%s209 + $0x90] sm:$0xff]
      %v242 = vld [vmem:[%s209 + $0x98] sm:$0xff]
      %v243 = vld [vmem:[%s209 + $0xa0] sm:$0xff]
      %v244 = vld [vmem:[%s209 + $0xa8] sm:$0xff]
      %v245 = vld [vmem:[%s209 + $0xb0] sm:$0xff]
      %v246 = vld [vmem:[%s209 + $0xb8] sm:$0xff]
      %v247 = vld [vmem:[%s209 + $0xc0] sm:$0xff]
      %v248 = vld [vmem:[%s209 + $0xc8] sm:$0xff]
      %v249 = vld [vmem:[%s209 + $0xd0] sm:$0xff]
      %v250 = vld [vmem:[%s209 + $0xd8] sm:$0xff]
      %v251 = vld [vmem:[%s209 + $0xe0] sm:$0xff]
      %v252 = vld [vmem:[%s209 + $0xe8] sm:$0xff]
      %v253 = vld [vmem:[%s209 + $0xf0] sm:$0xff]
      %v254 = vld [vmem:[%s209 + $0xf8] sm:$0xff]
      %v255 = vld [vmem:[%s1] sm:$0x1]
      %v257 = vlaneseq
      %v258 = vshrl.u32 %v257, 7
      %v259 = vsub.s32 0, %v258
      %v260 = vrot.slane %v255, %v259
      %v262 = vmul.f32 %v223, %v260
      %v263 = vmul.f32 %v224, %v260
      %v264 = vmul.f32 %v225, %v260
      %v265 = vmul.f32 %v226, %v260
      %v266 = vmul.f32 %v227, %v260
      %v267 = vmul.f32 %v228, %v260
      %v268 = vmul.f32 %v229, %v260
      %v269 = vmul.f32 %v230, %v260
      %v270 = vmul.f32 %v231, %v260
      %v271 = vmul.f32 %v232, %v260
      %v272 = vmul.f32 %v233, %v260
      %v273 = vmul.f32 %v234, %v260
      %v274 = vmul.f32 %v235, %v260
      %v275 = vmul.f32 %v236, %v260
      %v276 = vmul.f32 %v237, %v260
      %v277 = vmul.f32 %v238, %v260
      %v278 = vmul.f32 %v239, %v260
      %v279 = vmul.f32 %v240, %v260
      %v280 = vmul.f32 %v241, %v260
      %v281 = vmul.f32 %v242, %v260
      %v282 = vmul.f32 %v243, %v260
      %v283 = vmul.f32 %v244, %v260
      %v284 = vmul.f32 %v245, %v260
      %v285 = vmul.f32 %v246, %v260
      %v286 = vmul.f32 %v247, %v260
      %v287 = vmul.f32 %v248, %v260
      %v288 = vmul.f32 %v249, %v260
      %v289 = vmul.f32 %v250, %v260
      %v290 = vmul.f32 %v251, %v260
      %v291 = vmul.f32 %v252, %v260
      %v292 = vmul.f32 %v253, %v260
      %v293 = vmul.f32 %v254, %v260
      %v294 = vld [vmem:[%s2] sm:$0x1]
      %v296 = vlaneseq
      %v297 = vshrl.u32 %v296, 7
      %v298 = vsub.s32 0, %v297
      %v299 = vrot.slane %v294, %v298
      %v301 = vadd.f32 %v262, %v299
      %v302 = vadd.f32 %v263, %v299
      %v303 = vadd.f32 %v264, %v299
      %v304 = vadd.f32 %v265, %v299
      %v305 = vadd.f32 %v266, %v299
      %v306 = vadd.f32 %v267, %v299
      %v307 = vadd.f32 %v268, %v299
      %v308 = vadd.f32 %v269, %v299
      %v309 = vadd.f32 %v270, %v299
      %v310 = vadd.f32 %v271, %v299
      %v311 = vadd.f32 %v272, %v299
      %v312 = vadd.f32 %v273, %v299
      %v313 = vadd.f32 %v274, %v299
      %v314 = vadd.f32 %v275, %v299
      %v315 = vadd.f32 %v276, %v299
      %v316 = vadd.f32 %v277, %v299
      %v317 = vadd.f32 %v278, %v299
      %v318 = vadd.f32 %v279, %v299
      %v319 = vadd.f32 %v280, %v299
      %v320 = vadd.f32 %v281, %v299
      %v321 = vadd.f32 %v282, %v299
      %v322 = vadd.f32 %v283, %v299
      %v323 = vadd.f32 %v284, %v299
      %v324 = vadd.f32 %v285, %v299
      %v325 = vadd.f32 %v286, %v299
      %v326 = vadd.f32 %v287, %v299
      %v327 = vadd.f32 %v288, %v299
      %v328 = vadd.f32 %v289, %v299
      %v329 = vadd.f32 %v290, %v299
      %v330 = vadd.f32 %v291, %v299
      %v331 = vadd.f32 %v292, %v299
      %v332 = vadd.f32 %v293, %v299
      %v333 = vld [vmem:[%s215] sm:$0xff]
      %v334 = vld [vmem:[%s215 + $0x8] sm:$0xff]
      %v335 = vld [vmem:[%s215 + $0x10] sm:$0xff]
      %v336 = vld [vmem:[%s215 + $0x18] sm:$0xff]
      %v337 = vld [vmem:[%s215 + $0x20] sm:$0xff]
      %v338 = vld [vmem:[%s215 + $0x28] sm:$0xff]
      %v339 = vld [vmem:[%s215 + $0x30] sm:$0xff]
      %v340 = vld [vmem:[%s215 + $0x38] sm:$0xff]
      %v341 = vld [vmem:[%s215 + $0x40] sm:$0xff]
      %v342 = vld [vmem:[%s215 + $0x48] sm:$0xff]
      %v343 = vld [vmem:[%s215 + $0x50] sm:$0xff]
      %v344 = vld [vmem:[%s215 + $0x58] sm:$0xff]
      %v345 = vld [vmem:[%s215 + $0x60] sm:$0xff]
      %v346 = vld [vmem:[%s215 + $0x68] sm:$0xff]
      %v347 = vld [vmem:[%s215 + $0x70] sm:$0xff]
      %v348 = vld [vmem:[%s215 + $0x78] sm:$0xff]
      %v349 = vld [vmem:[%s215 + $0x80] sm:$0xff]
      %v350 = vld [vmem:[%s215 + $0x88] sm:$0xff]
      %v351 = vld [vmem:[%s215 + $0x90] sm:$0xff]
      %v352 = vld [vmem:[%s215 + $0x98] sm:$0xff]
      %v353 = vld [vmem:[%s215 + $0xa0] sm:$0xff]
      %v354 = vld [vmem:[%s215 + $0xa8] sm:$0xff]
      %v355 = vld [vmem:[%s215 + $0xb0] sm:$0xff]
      %v356 = vld [vmem:[%s215 + $0xb8] sm:$0xff]
      %v357 = vld [vmem:[%s215 + $0xc0] sm:$0xff]
      %v358 = vld [vmem:[%s215 + $0xc8] sm:$0xff]
      %v359 = vld [vmem:[%s215 + $0xd0] sm:$0xff]
      %v360 = vld [vmem:[%s215 + $0xd8] sm:$0xff]
      %v361 = vld [vmem:[%s215 + $0xe0] sm:$0xff]
      %v362 = vld [vmem:[%s215 + $0xe8] sm:$0xff]
      %v363 = vld [vmem:[%s215 + $0xf0] sm:$0xff]
      %v364 = vld [vmem:[%s215 + $0xf8] sm:$0xff]
      %v365 = vadd.f32 %v301, %v333
      %v366 = vadd.f32 %v302, %v334
      %v367 = vadd.f32 %v303, %v335
      %v368 = vadd.f32 %v304, %v336
      %v369 = vadd.f32 %v305, %v337
      %v370 = vadd.f32 %v306, %v338
      %v371 = vadd.f32 %v307, %v339
      %v372 = vadd.f32 %v308, %v340
      %v373 = vadd.f32 %v309, %v341
      %v374 = vadd.f32 %v310, %v342
      %v375 = vadd.f32 %v311, %v343
      %v376 = vadd.f32 %v312, %v344
      %v377 = vadd.f32 %v313, %v345
      %v378 = vadd.f32 %v314, %v346
      %v379 = vadd.f32 %v315, %v347
      %v380 = vadd.f32 %v316, %v348
      %v381 = vadd.f32 %v317, %v349
      %v382 = vadd.f32 %v318, %v350
      %v383 = vadd.f32 %v319, %v351
      %v384 = vadd.f32 %v320, %v352
      %v385 = vadd.f32 %v321, %v353
      %v386 = vadd.f32 %v322, %v354
      %v387 = vadd.f32 %v323, %v355
      %v388 = vadd.f32 %v324, %v356
      %v389 = vadd.f32 %v325, %v357
      %v390 = vadd.f32 %v326, %v358
      %v391 = vadd.f32 %v327, %v359
      %v392 = vadd.f32 %v328, %v360
      %v393 = vadd.f32 %v329, %v361
      %v394 = vadd.f32 %v330, %v362
      %v395 = vadd.f32 %v331, %v363
      %v396 = vadd.f32 %v332, %v364
      %v397 = vmax.f32 %v365, 0.0
      %v398 = vmax.f32 %v366, 0.0
      %v399 = vmax.f32 %v367, 0.0
      %v400 = vmax.f32 %v368, 0.0
      %v401 = vmax.f32 %v369, 0.0
      %v402 = vmax.f32 %v370, 0.0
      %v403 = vmax.f32 %v371, 0.0
      %v404 = vmax.f32 %v372, 0.0
      %v405 = vmax.f32 %v373, 0.0
      %v406 = vmax.f32 %v374, 0.0
      %v407 = vmax.f32 %v375, 0.0
      %v408 = vmax.f32 %v376, 0.0
      %v409 = vmax.f32 %v377, 0.0
      %v410 = vmax.f32 %v378, 0.0
      %v411 = vmax.f32 %v379, 0.0
      %v412 = vmax.f32 %v380, 0.0
      %v413 = vmax.f32 %v381, 0.0
      %v414 = vmax.f32 %v382, 0.0
      %v415 = vmax.f32 %v383, 0.0
      %v416 = vmax.f32 %v384, 0.0
      %v417 = vmax.f32 %v385, 0.0
      %v418 = vmax.f32 %v386, 0.0
      %v419 = vmax.f32 %v387, 0.0
      %v420 = vmax.f32 %v388, 0.0
      %v421 = vmax.f32 %v389, 0.0
      %v422 = vmax.f32 %v390, 0.0
      %v423 = vmax.f32 %v391, 0.0
      %v424 = vmax.f32 %v392, 0.0
      %v425 = vmax.f32 %v393, 0.0
      %v426 = vmax.f32 %v394, 0.0
      %v427 = vmax.f32 %v395, 0.0
      %v428 = vmax.f32 %v396, 0.0
      %429 = vst [vmem:[%s221] sm:$0xff] %v397
      %430 = vst [vmem:[%s221 + $0x8] sm:$0xff] %v398
      %431 = vst [vmem:[%s221 + $0x10] sm:$0xff] %v399
      %432 = vst [vmem:[%s221 + $0x18] sm:$0xff] %v400
      %433 = vst [vmem:[%s221 + $0x20] sm:$0xff] %v401
      %434 = vst [vmem:[%s221 + $0x28] sm:$0xff] %v402
      %435 = vst [vmem:[%s221 + $0x30] sm:$0xff] %v403
      %436 = vst [vmem:[%s221 + $0x38] sm:$0xff] %v404
      %437 = vst [vmem:[%s221 + $0x40] sm:$0xff] %v405
      %438 = vst [vmem:[%s221 + $0x48] sm:$0xff] %v406
      %439 = vst [vmem:[%s221 + $0x50] sm:$0xff] %v407
      %440 = vst [vmem:[%s221 + $0x58] sm:$0xff] %v408
      %441 = vst [vmem:[%s221 + $0x60] sm:$0xff] %v409
      %442 = vst [vmem:[%s221 + $0x68] sm:$0xff] %v410
      %443 = vst [vmem:[%s221 + $0x70] sm:$0xff] %v411
      %444 = vst [vmem:[%s221 + $0x78] sm:$0xff] %v412
      %445 = vst [vmem:[%s221 + $0x80] sm:$0xff] %v413
      %446 = vst [vmem:[%s221 + $0x88] sm:$0xff] %v414
      %447 = vst [vmem:[%s221 + $0x90] sm:$0xff] %v415
      %448 = vst [vmem:[%s221 + $0x98] sm:$0xff] %v416
      %449 = vst [vmem:[%s221 + $0xa0] sm:$0xff] %v417
      %450 = vst [vmem:[%s221 + $0xa8] sm:$0xff] %v418
      %451 = vst [vmem:[%s221 + $0xb0] sm:$0xff] %v419
      %452 = vst [vmem:[%s221 + $0xb8] sm:$0xff] %v420
      %453 = vst [vmem:[%s221 + $0xc0] sm:$0xff] %v421
      %454 = vst [vmem:[%s221 + $0xc8] sm:$0xff] %v422
      %455 = vst [vmem:[%s221 + $0xd0] sm:$0xff] %v423
      %456 = vst [vmem:[%s221 + $0xd8] sm:$0xff] %v424
      %457 = vst [vmem:[%s221 + $0xe0] sm:$0xff] %v425
      %458 = vst [vmem:[%s221 + $0xe8] sm:$0xff] %v426
      %459 = vst [vmem:[%s221 + $0xf0] sm:$0xff] %v427
      %460 = vst [vmem:[%s221 + $0xf8] sm:$0xff] %v428
      %s461 = smul.u32 32, %s15
      %p462 = scmp.lt.s32.totalorder %s461, 63
      %s463 = scalar_select %p462, %s461, 63
      %s464 = smul.addr %s463, 8
      %s465 = scalar_lea.vmem %s4, %s464
      // Predicated region
      $region37: #{a_call__.7} parent=35 // pred_check
        %p466 = pneg %p127
      $region38: #{a_call__.7} parent=35 // pred_check_branch
        %468 = sbr.rel (%p466) target = $region40
      $region39: #{a_call__.7} parent=35 // pred_region
        %s469 = smul.u32 32, %s15
      $region40: #{a_call__.7} parent=35 // pred_fallthru
        _
    $region36: #{a_call__.7} parent=5 // pred_fallthru
      _
    %p470 = scmp.le.s32.totalorder 2, %s10
    // Predicated region
    $region41: #{a_call__.7} parent=5 // pred_check
      %p471 = pneg %p470
    $region42: #{a_call__.7} parent=5 // pred_check_branch
      %473 = sbr.rel (%p471) target = $region44
    $region43: #{a_call__.7} parent=5 // pred_region
      %s474 = ssub.s32 %s10, 2
      // Predicated region
      $region45: #{a_call__.7} parent=43 // pred_check
        %p475 = pneg %p133
      $region46: #{a_call__.7} parent=43 // pred_check_branch
        %477 = sbr.rel (%p475) target = $region48
      $region47: #{a_call__.7} parent=43 // pred_region
        %s478 = smul.u32 32, %s16
        %p479 = scmp.lt.s32.totalorder %s478, 63
        %s480 = scalar_select %p479, %s478, 63
        %s481 = smul.addr %s480, 8
        %s482 = scalar_lea.vmem %s4, %s481
      $region48: #{a_call__.7} parent=43 // pred_fallthru
        _
    $region44: #{a_call__.7} parent=5 // pred_fallthru
      _
  $region6: #{a_call__.7} parent=0 // loop_footer
    %s14 = sadd.s32 1, %s10
  $region7: #{a_call__.7} parent=0 // loop_footer_branch
    %9 = sbr.rel target = $region3
  $region8: #{a_call__.7} parent=0 // loop_exit
    _

</llo_original>
